<compile_context>
chip_gen: v7x
topology: tpu7x:2x2x1
jax: 0.10.0
libtpu: 0.0.40
codegen_flags: <defaults>
</compile_context>

<pallas_src>
import functools
import math

import jax
import jax.numpy as jnp
from jax.experimental import pallas as pl
from jax.experimental.pallas import tpu as pltpu


_MXU_DTYPE = jnp.bfloat16        # MXU operands; accumulation stays f32
_NEG_BIG = -1e30                 # additive key-mask bias (exp underflows to exactly 0)


# --------------------------------------------------------------------------- in-kernel helpers
def _mxu_dot(a_f32, w_lowp):
    """bf16 x bf16 MXU matmul with f32 accumulation (weights already bf16)."""
    return jnp.dot(a_f32.astype(_MXU_DTYPE), w_lowp, preferred_element_type=jnp.float32)


def _layernorm(x, g, b, eps=1e-12):
    # x: (T, C); g, b: (1, C)
    mean = jnp.mean(x, axis=-1, keepdims=True)
    cen = x - mean
    var = jnp.mean(cen * cen, axis=-1, keepdims=True)
    return cen * jax.lax.rsqrt(var + eps) * g + b


def _conv1d_same(xn, w_taps, bias, relu):
    """'same' Conv1d over time using XLU rolls instead of a padded-copy + unaligned slices.

    xn:     (T, Cin) f32
    w_taps: list of K (Cin, Cout) bf16 tap matrices
    bias:   (1, Cout) f32
    out[t] = sum_k xn[t + k - pad_l] @ w_taps[k]   (zeros outside [0, T))
    """
    t = xn.shape[0]
    ksz = len(w_taps)
    pad_l = (ksz - 1) // 2
    row = jax.lax.broadcasted_iota(jnp.int32, (t, 1), 0)
    acc = jnp.zeros((t, w_taps[0].shape[1]), jnp.float32)
    for k in range(ksz):
        off = k - pad_l                       # source row offset
        if off == 0:
            xs = xn
        else:
            xs = pltpu.roll(xn, (-off) % t, axis=0)      # xs[r] = xn[(r + off) mod t]
            if off < 0:
                xs = jnp.where(row >= -off, xs, 0.0)     # zero wrapped leading rows
            else:
                xs = jnp.where(row < t - off, xs, 0.0)   # zero wrapped trailing rows
        acc = acc + _mxu_dot(xs, w_taps[k])
    acc = acc + bias
    if relu:
        acc = jnp.maximum(acc, 0.0)
    return acc


# --------------------------------------------------------------------------- fused encoder kernel
def _encoder_stack_kernel(lens_ref,                                     # scalar prefetch (SMEM)
                          x_ref,
                          ln1g_ref, ln1b_ref, wqkv_ref, bqkv_ref, wo_ref, bo_ref,
                          ln2g_ref, ln2b_ref, w1_ref, b1_ref, w2_ref, b2_ref,
                          ag_ref, ab_ref, pwm_ref, pbm_ref, pwl_ref, pbl_ref,
                          xo_ref, m_ref, logs_ref,                      # outputs
                          h_ref, o_ref,                                 # VMEM scratch (T, D)
                          *, heads, ksz):
    b = pl.program_id(0)
    l = pl.program_id(1)
    t, d = h_ref.shape
    dh = d // heads
    length = lens_ref[b]

    # Running activation lives in VMEM scratch across the whole layer stack.
    @pl.when(l == 0)
    def _():
        h_ref[...] = x_ref[0]

    x = h_ref[...]                                                      # (T, D) f32

    # Additive key-validity bias (1, T): 0 at valid keys, -1e30 at padded keys.
    kbias = jnp.where(
        jax.lax.broadcasted_iota(jnp.int32, (1, t), 1) < length, 0.0, _NEG_BIG)

    # ---------------- masked multi-head self-attention (pre-LN, fused QKV) ------------
    xn = _layernorm(x, ln1g_ref[l], ln1b_ref[l])
    qkv = _mxu_dot(xn, wqkv_ref[l]) + bqkv_ref[l]                       # (T, 3D) f32; Q pre-scaled
    for hh in range(heads):
        qh = qkv[:, hh * dh:(hh + 1) * dh].astype(_MXU_DTYPE)
        kh = qkv[:, d + hh * dh:d + (hh + 1) * dh].astype(_MXU_DTYPE)
        vh = qkv[:, 2 * d + hh * dh:2 * d + (hh + 1) * dh].astype(_MXU_DTYPE)
        s = jax.lax.dot_general(qh, kh, (((1,), (1,)), ((), ())),
                                preferred_element_type=jnp.float32) + kbias   # (T, T)
        s = s - jnp.max(s, axis=-1, keepdims=True)
        e = jnp.exp(s)                                                  # exactly 0 at masked keys
        inv = pl.reciprocal(jnp.sum(e, axis=-1, keepdims=True))         # exact reciprocal
        attn = (e * inv).astype(_MXU_DTYPE)
        o_ref[:, hh * dh:(hh + 1) * dh] = jnp.dot(
            attn, vh, preferred_element_type=jnp.float32)
    x = x + _mxu_dot(o_ref[...], wo_ref[l]) + bo_ref[l]

    # ---------------- positionwise Conv1d(k)+ReLU feed-forward (pre-LN) ---------------
    xn = _layernorm(x, ln2g_ref[l], ln2b_ref[l])
    taps1 = [w1_ref[l * ksz + k] for k in range(ksz)]
    hmid = _conv1d_same(xn, taps1, b1_ref[l], relu=True)
    taps2 = [w2_ref[l * ksz + k] for k in range(ksz)]
    x = x + _conv1d_same(hmid, taps2, b2_ref[l], relu=False)

    h_ref[...] = x

    # ---------------- final after_norm + proj Conv1d(D, 2D, 1) * x_mask ---------------
    @pl.when(l == pl.num_programs(1) - 1)
    def _():
        y = _layernorm(x, ag_ref[...], ab_ref[...])
        xo_ref[0] = y
        tmask = jax.lax.broadcasted_iota(jnp.int32, (t, 1), 0) < length
        m_val = _mxu_dot(y, pwm_ref[...]) + pbm_ref[...]
        lg_val = _mxu_dot(y, pwl_ref[...]) + pbl_ref[...]
        m_ref[0] = jnp.where(tmask, m_val, 0.0)
        logs_ref[0] = jnp.where(tmask, lg_val, 0.0)


def _encoder_stack(x, x_lengths, pk, heads, ksz):
    B, T, D = x.shape

    # per-batch activation blocks
    bm = lambda b, l, lens: (b, 0, 0)
    # VMEM-resident (constant-index) full-stack weight blocks — DMA'd once for the grid
    c3 = lambda b, l, lens: (0, 0, 0)
    c2 = lambda b, l, lens: (0, 0)

    def resident(arr):
        return pl.BlockSpec(arr.shape, c3 if arr.ndim == 3 else c2)

    weight_order = ["ln1_g", "ln1_b", "wqkv", "bqkv", "wo", "bo",
                    "ln2_g", "ln2_b", "ff_w1", "ff_b1", "ff_w2", "ff_b2",
                    "after_g", "after_b", "proj_wm", "proj_bm", "proj_wl", "proj_bl"]

    in_specs = [pl.BlockSpec((1, T, D), bm)] + [resident(pk[k]) for k in weight_order]
    out_specs = [pl.BlockSpec((1, T, D), bm)] * 3

    # VMEM budget: resident weights (x2 buffers allocated by the pipeline), activation /
    # output blocks (x2), plus the two f32 scratch tiles.  Explicit limit so that the
    # v5e (16 MiB) / v7x (32 MiB) scoped defaults don't reject real model dims.
    weight_bytes = sum(int(pk[k].nbytes) for k in weight_order)
    act_bytes = 4 * T * D * 4                       # x + 3 outputs, per buffer
    scratch_bytes = 2 * T * D * 4
    vmem_limit = int(min(100 * 2 ** 20,
                         max(32 * 2 ** 20,
                             2 * (weight_bytes + act_bytes) + scratch_bytes + (4 << 20))))

    L = pk["ln1_g"].shape[0]
    grid_spec = pltpu.PrefetchScalarGridSpec(
        num_scalar_prefetch=1,                      # x_lengths -> SMEM
        grid=(B, L),
        in_specs=in_specs,
        out_specs=out_specs,
        scratch_shapes=[pltpu.VMEM((T, D), jnp.float32),     # running activation
                        pltpu.VMEM((T, D), jnp.float32)],    # attention head-output slab
    )

    kern = functools.partial(_encoder_stack_kernel, heads=heads, ksz=ksz)
    xo, m, logs = pl.pallas_call(
        kern,
        grid_spec=grid_spec,
        out_shape=(
            jax.ShapeDtypeStruct((B, T, D), jnp.float32),
            jax.ShapeDtypeStruct((B, T, D), jnp.float32),
            jax.ShapeDtypeStruct((B, T, D), jnp.float32),
        ),
        compiler_params=pltpu.CompilerParams(
            # NOTE(v7x): for B == 1 inference the parallel axis has a single iteration
            # and one TensorCore idles; split work over query tiles / batch-block there.
            dimension_semantics=("parallel", "arbitrary"),
            vmem_limit_bytes=vmem_limit),
    )(x_lengths, x, *[pk[k] for k in weight_order])
    return xo, m, logs


# --------------------------------------------------------------------------- param packing
def _pack_params(params, heads):
    """Stack per-block weights along a leading layer axis, fuse QKV, fold 1/sqrt(d_k),
    cast all matmul weights to bf16 (biases / LN params stay f32)."""
    D = params["emb"].shape[1]
    dh = D // heads
    qscale = 1.0 / math.sqrt(dh)
    blocks = params["blocks"]
    wdt = _MXU_DTYPE

    def stack(fn):
        return jnp.stack([fn(p) for p in blocks], axis=0)

    def stack_taps(key):
        w = jnp.stack([p[key] for p in blocks], axis=0)     # (L, K, Cin, Cout)
        L, K, cin, cout = w.shape
        return w.reshape(L * K, cin, cout).astype(wdt)      # flat (layer, tap) leading axis

    proj_w = params["proj_w"]
    proj_b = params["proj_b"]
    return {
        "ln1_g": stack(lambda p: p["ln_mha_g"].reshape(1, D)),
        "ln1_b": stack(lambda p: p["ln_mha_b"].reshape(1, D)),
        "wqkv": stack(lambda p: jnp.concatenate(
            [p["wq"] * qscale, p["wk"], p["wv"]], axis=1)).astype(wdt),
        "bqkv": stack(lambda p: jnp.concatenate(
            [p["bq"] * qscale, p["bk"], p["bv"]]).reshape(1, 3 * D)),
        "wo": stack(lambda p: p["wo"]).astype(wdt),
        "bo": stack(lambda p: p["bo"].reshape(1, D)),
        "ln2_g": stack(lambda p: p["ln_ff_g"].reshape(1, D)),
        "ln2_b": stack(lambda p: p["ln_ff_b"].reshape(1, D)),
        "ff_w1": stack_taps("ff_w1"),
        "ff_b1": stack(lambda p: p["ff_b1"].reshape(1, -1)),
        "ff_w2": stack_taps("ff_w2"),
        "ff_b2": stack(lambda p: p["ff_b2"].reshape(1, D)),
        "after_g": params["after_g"].reshape(1, D),
        "after_b": params["after_b"].reshape(1, D),
        "proj_wm": proj_w[:, :D].astype(wdt),
        "proj_wl": proj_w[:, D:].astype(wdt),
        "proj_bm": proj_b[:D].reshape(1, D),
        "proj_bl": proj_b[D:].reshape(1, D),
    }


# --------------------------------------------------------------------------- model
def init_params(key, vocab, d, ff, ksz, blocks):
    keys = jax.random.split(key, 8 + blocks)

    def nrm(k, shape, scale=0.02):
        return scale * jax.random.normal(k, shape, dtype=jnp.float32)

    params = {
        "emb": nrm(keys[0], (vocab, d), 1.0),
        "after_g": jnp.ones((d,), jnp.float32),
        "after_b": jnp.zeros((d,), jnp.float32),
        "proj_w": nrm(keys[1], (d, 2 * d)),
        "proj_b": jnp.zeros((2 * d,), jnp.float32),
        "blocks": [],
    }
    for bidx in range(blocks):
        bkeys = jax.random.split(keys[8 + bidx], 6)
        params["blocks"].append(
            {
                "ln_mha_g": jnp.ones((d,), jnp.float32),
                "ln_mha_b": jnp.zeros((d,), jnp.float32),
                "wq": nrm(bkeys[0], (d, d)), "bq": jnp.zeros((d,), jnp.float32),
                "wk": nrm(bkeys[1], (d, d)), "bk": jnp.zeros((d,), jnp.float32),
                "wv": nrm(bkeys[2], (d, d)), "bv": jnp.zeros((d,), jnp.float32),
                "wo": nrm(bkeys[3], (d, d)), "bo": jnp.zeros((d,), jnp.float32),
                "ln_ff_g": jnp.ones((d,), jnp.float32),
                "ln_ff_b": jnp.zeros((d,), jnp.float32),
                "ff_w1": nrm(bkeys[4], (ksz, d, ff)), "ff_b1": jnp.zeros((ff,), jnp.float32),
                "ff_w2": nrm(bkeys[5], (ksz, ff, d)), "ff_b2": jnp.zeros((d,), jnp.float32),
            }
        )
    return params


def onnx_text_encoder(params, x_ids, x_lengths, heads):
    B, T = x_ids.shape
    D = params["emb"].shape[1]
    assert D % heads == 0
    ksz = params["blocks"][0]["ff_w1"].shape[0]

    # emb(x) * sqrt(D)  then RelPositionalEncoding xscale (* sqrt(D))  ==  * D
    x = params["emb"][x_ids] * float(D)

    # x_mask = 1 - make_pad_mask(x_lengths).unsqueeze(1).float()  -> (B, 1, T), 1 = valid
    idx = jnp.arange(T, dtype=jnp.int32)[None, :]
    x_mask = (idx < x_lengths[:, None]).astype(jnp.float32)[:, None, :]

    pk = _pack_params(params, heads)
    xo, m, logs = _encoder_stack(x, x_lengths.astype(jnp.int32), pk, heads, ksz)

    x_out = jnp.transpose(xo, (0, 2, 1))        # (B, D, T)   == x.transpose(1, 2)
    m_out = jnp.transpose(m, (0, 2, 1))         # (B, D, T)
    logs_out = jnp.transpose(logs, (0, 2, 1))   # (B, D, T)
    return x_out, m_out, logs_out, x_mask


# --------------------------------------------------------------------------- pure-JAX reference
def _reference_forward(params, x_ids, x_lengths, heads):
    B, T = x_ids.shape
    D = params["emb"].shape[1]
    dh = D // heads
    x = params["emb"][x_ids] * float(D)
    valid = (jnp.arange(T)[None, :] < x_lengths[:, None])
    kbias = jnp.where(valid, 0.0, _NEG_BIG)[:, None, None, :]          # (B,1,1,T)

    def ln(v, g, b, eps=1e-12):
        mu = v.mean(-1, keepdims=True)
        var = ((v - mu) ** 2).mean(-1, keepdims=True)
        return (v - mu) / jnp.sqrt(var + eps) * g + b

    def conv(z, w, bias):
        ksz = w.shape[0]
        pad_l = (ksz - 1) // 2
        zp = jnp.pad(z, ((0, 0), (pad_l, ksz - 1 - pad_l), (0, 0)))
        return sum(zp[:, kk:kk + T, :] @ w[kk] for kk in range(ksz)) + bias

    for p in params["blocks"]:
        xn = ln(x, p["ln_mha_g"], p["ln_mha_b"])
        q = xn @ p["wq"] + p["bq"]
        k = xn @ p["wk"] + p["bk"]
        v = xn @ p["wv"] + p["bv"]
        split = lambda z: z.reshape(B, T, heads, dh).transpose(0, 2, 1, 3)
        s = jnp.einsum("bhqd,bhkd->bhqk", split(q), split(k)) / math.sqrt(dh) + kbias
        a = jax.nn.softmax(s, axis=-1)
        o = jnp.einsum("bhqk,bhkd->bhqd", a, split(v)).transpose(0, 2, 1, 3).reshape(B, T, D)
        x = x + o @ p["wo"] + p["bo"]
        xn = ln(x, p["ln_ff_g"], p["ln_ff_b"])
        h = jax.nn.relu(conv(xn, p["ff_w1"], p["ff_b1"]))
        x = x + conv(h, p["ff_w2"], p["ff_b2"])
    y = ln(x, params["after_g"], params["after_b"])
    stats = (y @ params["proj_w"] + params["proj_b"]) * valid[:, :, None].astype(jnp.float32)
    m, logs = stats[..., :D], stats[..., D:]
    return (jnp.transpose(y, (0, 2, 1)), jnp.transpose(m, (0, 2, 1)),
            jnp.transpose(logs, (0, 2, 1)), valid[:, None, :].astype(jnp.float32))


# --------------------------------------------------------------------------- main
if __name__ == "__main__":
    B, T = 2, 8
    VOCAB, D, HEADS, FF, BLOCKS, KSZ = 40, 32, 2, 64, 2, 3

    key = jax.random.PRNGKey(0)
    kp, kx = jax.random.split(key, 2)

    params = init_params(kp, VOCAB, D, FF, KSZ, BLOCKS)
    x_ids = jax.random.randint(kx, (B, T), 0, VOCAB, dtype=jnp.int32)
    x_lengths = jnp.array([T, 5], dtype=jnp.int32)

    fwd = jax.jit(functools.partial(onnx_text_encoder, heads=HEADS))
    x_out, m, logs, x_mask = jax.block_until_ready(fwd(params, x_ids, x_lengths))

    assert x_out.shape == (B, D, T)
    assert m.shape == (B, D, T)
    assert logs.shape == (B, D, T)
    assert x_mask.shape == (B, 1, T)
    assert jnp.all(jnp.isfinite(x_out)) and jnp.all(jnp.isfinite(m)) and jnp.all(jnp.isfinite(logs))
    # padded time steps of stats must be zeroed by x_mask
    assert jnp.all(jnp.abs(m[1, :, 5:]) == 0.0) and jnp.all(jnp.abs(logs[1, :, 5:]) == 0.0)

    # numerical check against a pure-JAX f32 reference (bf16 MXU operands -> loose tol)
    rx, rm, rl, rmask = _reference_forward(params, x_ids, x_lengths, HEADS)
    assert float(jnp.max(jnp.abs(x_out - rx))) < 5e-2
    assert float(jnp.max(jnp.abs(m - rm))) < 5e-2
    assert float(jnp.max(jnp.abs(logs - rl))) < 5e-2
    assert jnp.all(x_mask == rmask)

    print("KERNEL_OK")
</pallas_src>

<mosaic_0001>
module attributes {stable_mosaic.version = 11 : i64} {
  func.func @_encoder_stack_kernel(%arg0: i32, %arg1: i32, %arg2: memref<2xi32, #tpu.memory_space<smem>>, %arg3: memref<1x8x32xf32, #tpu.memory_space<vmem>>, %arg4: memref<2x1x32xf32, #tpu.memory_space<vmem>>, %arg5: memref<2x1x32xf32, #tpu.memory_space<vmem>>, %arg6: memref<2x32x96xbf16, #tpu.memory_space<vmem>>, %arg7: memref<2x1x96xf32, #tpu.memory_space<vmem>>, %arg8: memref<2x32x32xbf16, #tpu.memory_space<vmem>>, %arg9: memref<2x1x32xf32, #tpu.memory_space<vmem>>, %arg10: memref<2x1x32xf32, #tpu.memory_space<vmem>>, %arg11: memref<2x1x32xf32, #tpu.memory_space<vmem>>, %arg12: memref<6x32x64xbf16, #tpu.memory_space<vmem>>, %arg13: memref<2x1x64xf32, #tpu.memory_space<vmem>>, %arg14: memref<6x64x32xbf16, #tpu.memory_space<vmem>>, %arg15: memref<2x1x32xf32, #tpu.memory_space<vmem>>, %arg16: memref<1x32xf32, #tpu.memory_space<vmem>>, %arg17: memref<1x32xf32, #tpu.memory_space<vmem>>, %arg18: memref<32x32xbf16, #tpu.memory_space<vmem>>, %arg19: memref<1x32xf32, #tpu.memory_space<vmem>>, %arg20: memref<32x32xbf16, #tpu.memory_space<vmem>>, %arg21: memref<1x32xf32, #tpu.memory_space<vmem>>, %arg22: memref<1x8x32xf32, #tpu.memory_space<vmem>>, %arg23: memref<1x8x32xf32, #tpu.memory_space<vmem>>, %arg24: memref<1x8x32xf32, #tpu.memory_space<vmem>>, %arg25: memref<8x32xf32, #tpu.memory_space<vmem>>, %arg26: memref<8x32xf32, #tpu.memory_space<vmem>>) attributes {dimension_semantics = [#tpu.dimension_semantics<parallel>, #tpu.dimension_semantics<arbitrary>], iteration_bounds = array<i64: 2, 2>, scalar_prefetch = 1 : i64, scratch_operands = 2 : i64, tpu.core_type = #tpu.core_type<tc>, window_params = [{transform_indices = @transform_0, window_bounds = array<i64: 1, 8, 32>}, {pipeline_mode = #tpu.pipeline_mode<synchronous>, transform_indices = @transform_1, window_bounds = array<i64: 2, 1, 32>}, {pipeline_mode = #tpu.pipeline_mode<synchronous>, transform_indices = @transform_2, window_bounds = array<i64: 2, 1, 32>}, {pipeline_mode = #tpu.pipeline_mode<synchronous>, transform_indices = @transform_3, window_bounds = array<i64: 2, 32, 96>}, {pipeline_mode = #tpu.pipeline_mode<synchronous>, transform_indices = @transform_4, window_bounds = array<i64: 2, 1, 96>}, {pipeline_mode = #tpu.pipeline_mode<synchronous>, transform_indices = @transform_5, window_bounds = array<i64: 2, 32, 32>}, {pipeline_mode = #tpu.pipeline_mode<synchronous>, transform_indices = @transform_6, window_bounds = array<i64: 2, 1, 32>}, {pipeline_mode = #tpu.pipeline_mode<synchronous>, transform_indices = @transform_7, window_bounds = array<i64: 2, 1, 32>}, {pipeline_mode = #tpu.pipeline_mode<synchronous>, transform_indices = @transform_8, window_bounds = array<i64: 2, 1, 32>}, {pipeline_mode = #tpu.pipeline_mode<synchronous>, transform_indices = @transform_9, window_bounds = array<i64: 6, 32, 64>}, {pipeline_mode = #tpu.pipeline_mode<synchronous>, transform_indices = @transform_10, window_bounds = array<i64: 2, 1, 64>}, {pipeline_mode = #tpu.pipeline_mode<synchronous>, transform_indices = @transform_11, window_bounds = array<i64: 6, 64, 32>}, {pipeline_mode = #tpu.pipeline_mode<synchronous>, transform_indices = @transform_12, window_bounds = array<i64: 2, 1, 32>}, {pipeline_mode = #tpu.pipeline_mode<synchronous>, transform_indices = @transform_13, window_bounds = array<i64: 1, 32>}, {pipeline_mode = #tpu.pipeline_mode<synchronous>, transform_indices = @transform_14, window_bounds = array<i64: 1, 32>}, {pipeline_mode = #tpu.pipeline_mode<synchronous>, transform_indices = @transform_15, window_bounds = array<i64: 32, 32>}, {pipeline_mode = #tpu.pipeline_mode<synchronous>, transform_indices = @transform_16, window_bounds = array<i64: 1, 32>}, {pipeline_mode = #tpu.pipeline_mode<synchronous>, transform_indices = @transform_17, window_bounds = array<i64: 32, 32>}, {pipeline_mode = #tpu.pipeline_mode<synchronous>, transform_indices = @transform_18, window_bounds = array<i64: 1, 32>}, {transform_indices = @transform_19, window_bounds = array<i64: 1, 8, 32>}, {transform_indices = @transform_20, window_bounds = array<i64: 1, 8, 32>}, {transform_indices = @transform_21, window_bounds = array<i64: 1, 8, 32>}]} {
    %0 = arith.index_cast %arg0 : i32 to index
    %1 = memref.load %arg2[%0] : memref<2xi32, #tpu.memory_space<smem>>
    %c0_i32 = arith.constant 0 : i32
    %2 = arith.cmpi eq, %arg1, %c0_i32 : i32
    %3 = arith.extui %2 : i1 to i32
    %c0_i32_0 = arith.constant 0 : i32
    %4 = arith.cmpi ne, %3, %c0_i32_0 : i32
    scf.if %4 {
      %c0_93 = arith.constant 0 : index
      %c0_94 = arith.constant 0 : index
      %c0_95 = arith.constant 0 : index
      %227 = vector.load %arg3[%c0_93, %c0_94, %c0_95] : memref<1x8x32xf32, #tpu.memory_space<vmem>>, vector<1x8x32xf32>
      %228 = vector.shape_cast %227 : vector<1x8x32xf32> to vector<8x32xf32>
      %c0_96 = arith.constant 0 : index
      %c0_97 = arith.constant 0 : index
      %229 = vector.load %arg25[%c0_96, %c0_97] : memref<8x32xf32, #tpu.memory_space<vmem>>, vector<8x32xf32>
      tpu.vector_store %arg25[%c0_96, %c0_97], %228 {strides = array<i32>} : memref<8x32xf32, #tpu.memory_space<vmem>>, vector<8x32xf32>,
    } else {
    }
    %c0 = arith.constant 0 : index
    %c0_1 = arith.constant 0 : index
    %5 = vector.load %arg25[%c0, %c0_1] : memref<8x32xf32, #tpu.memory_space<vmem>>, vector<8x32xf32>
    %6 = tpu.iota {dimensions = array<i32: 1>} : vector<1x8xi32>
    %7 = vector.broadcast %1 : i32 to vector<1x8xi32>
    %8 = arith.cmpi slt, %6, %7 : vector<1x8xi32>
    %cst = arith.constant 0.000000e+00 : f32
    %cst_2 = arith.constant -1.000000e+30 : f32
    %9 = vector.broadcast %cst : f32 to vector<1x8xf32>
    %10 = vector.broadcast %cst_2 : f32 to vector<1x8xf32>
    %11 = arith.select %8, %9, %10 : vector<1x8xi1>, vector<1x8xf32>
    %12 = arith.index_cast %arg1 : i32 to index
    %c0_3 = arith.constant 0 : index
    %c0_4 = arith.constant 0 : index
    %13 = vector.load %arg4[%12, %c0_3, %c0_4] : memref<2x1x32xf32, #tpu.memory_space<vmem>>, vector<1x1x32xf32>
    %14 = vector.shape_cast %13 : vector<1x1x32xf32> to vector<1x32xf32>
    %15 = arith.index_cast %arg1 : i32 to index
    %c0_5 = arith.constant 0 : index
    %c0_6 = arith.constant 0 : index
    %16 = vector.load %arg5[%15, %c0_5, %c0_6] : memref<2x1x32xf32, #tpu.memory_space<vmem>>, vector<1x1x32xf32>
    %17 = vector.shape_cast %16 : vector<1x1x32xf32> to vector<1x32xf32>
    %cst_7 = arith.constant dense<0.000000e+00> : vector<8xf32>
    %18 = vector.multi_reduction <add>, %5, %cst_7 [1] : vector<8x32xf32> to vector<8xf32>
    %19 = vector.shape_cast %18 : vector<8xf32> to vector<8x1xf32>
    %cst_8 = arith.constant 3.200000e+01 : f32
    %20 = vector.broadcast %cst_8 : f32 to vector<8x1xf32>
    %21 = arith.divf %19, %20 : vector<8x1xf32>
    %22 = vector.broadcast %21 : vector<8x1xf32> to vector<8x32xf32>
    %23 = arith.subf %5, %22 : vector<8x32xf32>
    %24 = arith.mulf %23, %23 : vector<8x32xf32>
    %cst_9 = arith.constant dense<0.000000e+00> : vector<8xf32>
    %25 = vector.multi_reduction <add>, %24, %cst_9 [1] : vector<8x32xf32> to vector<8xf32>
    %26 = vector.shape_cast %25 : vector<8xf32> to vector<8x1xf32>
    %cst_10 = arith.constant 3.200000e+01 : f32
    %27 = vector.broadcast %cst_10 : f32 to vector<8x1xf32>
    %28 = arith.divf %26, %27 : vector<8x1xf32>
    %cst_11 = arith.constant 9.99999996E-13 : f32
    %29 = vector.broadcast %cst_11 : f32 to vector<8x1xf32>
    %30 = arith.addf %28, %29 : vector<8x1xf32>
    %31 = math.rsqrt %30 : vector<8x1xf32>
    %32 = vector.broadcast %31 : vector<8x1xf32> to vector<8x32xf32>
    %33 = arith.mulf %23, %32 : vector<8x32xf32>
    %34 = vector.broadcast %14 : vector<1x32xf32> to vector<8x32xf32>
    %35 = arith.mulf %33, %34 : vector<8x32xf32>
    %36 = vector.broadcast %17 : vector<1x32xf32> to vector<8x32xf32>
    %37 = arith.addf %35, %36 : vector<8x32xf32>
    %38 = arith.index_cast %arg1 : i32 to index
    %c0_12 = arith.constant 0 : index
    %c0_13 = arith.constant 0 : index
    %39 = vector.load %arg6[%38, %c0_12, %c0_13] : memref<2x32x96xbf16, #tpu.memory_space<vmem>>, vector<1x32x96xbf16>
    %40 = vector.shape_cast %39 : vector<1x32x96xbf16> to vector<32x96xbf16>
    %41 = arith.truncf %37 : vector<8x32xf32> to vector<8x32xbf16>
    %cst_14 = arith.constant dense<0.000000e+00> : vector<8x96xf32>
    %42 = tpu.matmul %41, %40, %cst_14 {dimension_numbers = #tpu.dot_dimension_numbers<[1], [0], [0], [1], [0, 0, 1, 1], [], []>} : vector<8x32xbf16>, vector<32x96xbf16>, vector<8x96xf32> -> vector<8x96xf32>
    %43 = arith.index_cast %arg1 : i32 to index
    %c0_15 = arith.constant 0 : index
    %c0_16 = arith.constant 0 : index
    %44 = vector.load %arg7[%43, %c0_15, %c0_16] : memref<2x1x96xf32, #tpu.memory_space<vmem>>, vector<1x1x96xf32>
    %45 = vector.shape_cast %44 : vector<1x1x96xf32> to vector<1x96xf32>
    %46 = vector.broadcast %45 : vector<1x96xf32> to vector<8x96xf32>
    %47 = arith.addf %42, %46 : vector<8x96xf32>
    %48 = vector.extract_strided_slice %47 {offsets = [0, 0], sizes = [8, 16], strides = [1, 1]} : vector<8x96xf32> to vector<8x16xf32>
    %49 = arith.truncf %48 : vector<8x16xf32> to vector<8x16xbf16>
    %50 = vector.extract_strided_slice %47 {offsets = [0, 32], sizes = [8, 16], strides = [1, 1]} : vector<8x96xf32> to vector<8x16xf32>
    %51 = arith.truncf %50 : vector<8x16xf32> to vector<8x16xbf16>
    %52 = vector.extract_strided_slice %47 {offsets = [0, 64], sizes = [8, 16], strides = [1, 1]} : vector<8x96xf32> to vector<8x16xf32>
    %53 = arith.truncf %52 : vector<8x16xf32> to vector<8x16xbf16>
    %cst_17 = arith.constant dense<0.000000e+00> : vector<8x8xf32>
    %54 = tpu.matmul %49, %51, %cst_17 {dimension_numbers = #tpu.dot_dimension_numbers<[1], [1], [0], [0], [0, 0, 1, 0], [], []>} : vector<8x16xbf16>, vector<8x16xbf16>, vector<8x8xf32> -> vector<8x8xf32>
    %55 = vector.broadcast %11 : vector<1x8xf32> to vector<8x8xf32>
    %56 = arith.addf %54, %55 : vector<8x8xf32>
    %cst_18 = arith.constant dense<0xFF800000> : vector<8xf32>
    %57 = vector.multi_reduction <maximumf>, %56, %cst_18 [1] : vector<8x8xf32> to vector<8xf32>
    %58 = vector.shape_cast %57 : vector<8xf32> to vector<8x1xf32>
    %59 = vector.broadcast %58 : vector<8x1xf32> to vector<8x8xf32>
    %60 = arith.subf %56, %59 : vector<8x8xf32>
    %61 = math.exp %60 : vector<8x8xf32>
    %cst_19 = arith.constant dense<0.000000e+00> : vector<8xf32>
    %62 = vector.multi_reduction <add>, %61, %cst_19 [1] : vector<8x8xf32> to vector<8xf32>
    %63 = vector.shape_cast %62 : vector<8xf32> to vector<8x1xf32>
    %64 = tpu.reciprocal %63 : vector<8x1xf32> -> vector<8x1xf32>
    %65 = vector.broadcast %64 : vector<8x1xf32> to vector<8x8xf32>
    %66 = arith.mulf %61, %65 : vector<8x8xf32>
    %67 = arith.truncf %66 : vector<8x8xf32> to vector<8x8xbf16>
    %cst_20 = arith.constant dense<0.000000e+00> : vector<8x16xf32>
    %68 = tpu.matmul %67, %53, %cst_20 {dimension_numbers = #tpu.dot_dimension_numbers<[1], [0], [0], [1], [0, 0, 1, 1], [], []>} : vector<8x8xbf16>, vector<8x16xbf16>, vector<8x16xf32> -> vector<8x16xf32>
    %c0_21 = arith.constant 0 : index
    %c0_22 = arith.constant 0 : index
    %69 = vector.load %arg26[%c0_21, %c0_22] : memref<8x32xf32, #tpu.memory_space<vmem>>, vector<8x16xf32>
    tpu.vector_store %arg26[%c0_21, %c0_22], %68 {strides = array<i32>} : memref<8x32xf32, #tpu.memory_space<vmem>>, vector<8x16xf32>,
    %70 = vector.extract_strided_slice %47 {offsets = [0, 16], sizes = [8, 16], strides = [1, 1]} : vector<8x96xf32> to vector<8x16xf32>
    %71 = arith.truncf %70 : vector<8x16xf32> to vector<8x16xbf16>
    %72 = vector.extract_strided_slice %47 {offsets = [0, 48], sizes = [8, 16], strides = [1, 1]} : vector<8x96xf32> to vector<8x16xf32>
    %73 = arith.truncf %72 : vector<8x16xf32> to vector<8x16xbf16>
    %74 = vector.extract_strided_slice %47 {offsets = [0, 80], sizes = [8, 16], strides = [1, 1]} : vector<8x96xf32> to vector<8x16xf32>
    %75 = arith.truncf %74 : vector<8x16xf32> to vector<8x16xbf16>
    %cst_23 = arith.constant dense<0.000000e+00> : vector<8x8xf32>
    %76 = tpu.matmul %71, %73, %cst_23 {dimension_numbers = #tpu.dot_dimension_numbers<[1], [1], [0], [0], [0, 0, 1, 0], [], []>} : vector<8x16xbf16>, vector<8x16xbf16>, vector<8x8xf32> -> vector<8x8xf32>
    %77 = vector.broadcast %11 : vector<1x8xf32> to vector<8x8xf32>
    %78 = arith.addf %76, %77 : vector<8x8xf32>
    %cst_24 = arith.constant dense<0xFF800000> : vector<8xf32>
    %79 = vector.multi_reduction <maximumf>, %78, %cst_24 [1] : vector<8x8xf32> to vector<8xf32>
    %80 = vector.shape_cast %79 : vector<8xf32> to vector<8x1xf32>
    %81 = vector.broadcast %80 : vector<8x1xf32> to vector<8x8xf32>
    %82 = arith.subf %78, %81 : vector<8x8xf32>
    %83 = math.exp %82 : vector<8x8xf32>
    %cst_25 = arith.constant dense<0.000000e+00> : vector<8xf32>
    %84 = vector.multi_reduction <add>, %83, %cst_25 [1] : vector<8x8xf32> to vector<8xf32>
    %85 = vector.shape_cast %84 : vector<8xf32> to vector<8x1xf32>
    %86 = tpu.reciprocal %85 : vector<8x1xf32> -> vector<8x1xf32>
    %87 = vector.broadcast %86 : vector<8x1xf32> to vector<8x8xf32>
    %88 = arith.mulf %83, %87 : vector<8x8xf32>
    %89 = arith.truncf %88 : vector<8x8xf32> to vector<8x8xbf16>
    %cst_26 = arith.constant dense<0.000000e+00> : vector<8x16xf32>
    %90 = tpu.matmul %89, %75, %cst_26 {dimension_numbers = #tpu.dot_dimension_numbers<[1], [0], [0], [1], [0, 0, 1, 1], [], []>} : vector<8x8xbf16>, vector<8x16xbf16>, vector<8x16xf32> -> vector<8x16xf32>
    %c0_27 = arith.constant 0 : index
    %c16 = arith.constant 16 : index
    %91 = vector.load %arg26[%c0_27, %c16] : memref<8x32xf32, #tpu.memory_space<vmem>>, vector<8x16xf32>
    tpu.vector_store %arg26[%c0_27, %c16], %90 {strides = array<i32>} : memref<8x32xf32, #tpu.memory_space<vmem>>, vector<8x16xf32>,
    %c0_28 = arith.constant 0 : index
    %c0_29 = arith.constant 0 : index
    %92 = vector.load %arg26[%c0_28, %c0_29] : memref<8x32xf32, #tpu.memory_space<vmem>>, vector<8x32xf32>
    %93 = arith.index_cast %arg1 : i32 to index
    %c0_30 = arith.constant 0 : index
    %c0_31 = arith.constant 0 : index
    %94 = vector.load %arg8[%93, %c0_30, %c0_31] : memref<2x32x32xbf16, #tpu.memory_space<vmem>>, vector<1x32x32xbf16>
    %95 = vector.shape_cast %94 : vector<1x32x32xbf16> to vector<32x32xbf16>
    %96 = arith.truncf %92 : vector<8x32xf32> to vector<8x32xbf16>
    %cst_32 = arith.constant dense<0.000000e+00> : vector<8x32xf32>
    %97 = tpu.matmul %96, %95, %cst_32 {dimension_numbers = #tpu.dot_dimension_numbers<[1], [0], [0], [1], [0, 0, 1, 1], [], []>} : vector<8x32xbf16>, vector<32x32xbf16>, vector<8x32xf32> -> vector<8x32xf32>
    %98 = arith.addf %5, %97 : vector<8x32xf32>
    %99 = arith.index_cast %arg1 : i32 to index
    %c0_33 = arith.constant 0 : index
    %c0_34 = arith.constant 0 : index
    %100 = vector.load %arg9[%99, %c0_33, %c0_34] : memref<2x1x32xf32, #tpu.memory_space<vmem>>, vector<1x1x32xf32>
    %101 = vector.shape_cast %100 : vector<1x1x32xf32> to vector<1x32xf32>
    %102 = vector.broadcast %101 : vector<1x32xf32> to vector<8x32xf32>
    %103 = arith.addf %98, %102 : vector<8x32xf32>
    %104 = arith.index_cast %arg1 : i32 to index
    %c0_35 = arith.constant 0 : index
    %c0_36 = arith.constant 0 : index
    %105 = vector.load %arg10[%104, %c0_35, %c0_36] : memref<2x1x32xf32, #tpu.memory_space<vmem>>, vector<1x1x32xf32>
    %106 = vector.shape_cast %105 : vector<1x1x32xf32> to vector<1x32xf32>
    %107 = arith.index_cast %arg1 : i32 to index
    %c0_37 = arith.constant 0 : index
    %c0_38 = arith.constant 0 : index
    %108 = vector.load %arg11[%107, %c0_37, %c0_38] : memref<2x1x32xf32, #tpu.memory_space<vmem>>, vector<1x1x32xf32>
    %109 = vector.shape_cast %108 : vector<1x1x32xf32> to vector<1x32xf32>
    %cst_39 = arith.constant dense<0.000000e+00> : vector<8xf32>
    %110 = vector.multi_reduction <add>, %103, %cst_39 [1] : vector<8x32xf32> to vector<8xf32>
    %111 = vector.shape_cast %110 : vector<8xf32> to vector<8x1xf32>
    %cst_40 = arith.constant 3.200000e+01 : f32
    %112 = vector.broadcast %cst_40 : f32 to vector<8x1xf32>
    %113 = arith.divf %111, %112 : vector<8x1xf32>
    %114 = vector.broadcast %113 : vector<8x1xf32> to vector<8x32xf32>
    %115 = arith.subf %103, %114 : vector<8x32xf32>
    %116 = arith.mulf %115, %115 : vector<8x32xf32>
    %cst_41 = arith.constant dense<0.000000e+00> : vector<8xf32>
    %117 = vector.multi_reduction <add>, %116, %cst_41 [1] : vector<8x32xf32> to vector<8xf32>
    %118 = vector.shape_cast %117 : vector<8xf32> to vector<8x1xf32>
    %cst_42 = arith.constant 3.200000e+01 : f32
    %119 = vector.broadcast %cst_42 : f32 to vector<8x1xf32>
    %120 = arith.divf %118, %119 : vector<8x1xf32>
    %cst_43 = arith.constant 9.99999996E-13 : f32
    %121 = vector.broadcast %cst_43 : f32 to vector<8x1xf32>
    %122 = arith.addf %120, %121 : vector<8x1xf32>
    %123 = math.rsqrt %122 : vector<8x1xf32>
    %124 = vector.broadcast %123 : vector<8x1xf32> to vector<8x32xf32>
    %125 = arith.mulf %115, %124 : vector<8x32xf32>
    %126 = vector.broadcast %106 : vector<1x32xf32> to vector<8x32xf32>
    %127 = arith.mulf %125, %126 : vector<8x32xf32>
    %128 = vector.broadcast %109 : vector<1x32xf32> to vector<8x32xf32>
    %129 = arith.addf %127, %128 : vector<8x32xf32>
    %c3_i32 = arith.constant 3 : i32
    %130 = arith.muli %arg1, %c3_i32 : i32
    %c0_i32_44 = arith.constant 0 : i32
    %131 = arith.addi %130, %c0_i32_44 : i32
    %132 = arith.index_cast %131 : i32 to index
    %c0_45 = arith.constant 0 : index
    %c0_46 = arith.constant 0 : index
    %133 = vector.load %arg12[%132, %c0_45, %c0_46] : memref<6x32x64xbf16, #tpu.memory_space<vmem>>, vector<1x32x64xbf16>
    %134 = vector.shape_cast %133 : vector<1x32x64xbf16> to vector<32x64xbf16>
    %c3_i32_47 = arith.constant 3 : i32
    %135 = arith.muli %arg1, %c3_i32_47 : i32
    %c1_i32 = arith.constant 1 : i32
    %136 = arith.addi %135, %c1_i32 : i32
    %137 = arith.index_cast %136 : i32 to index
    %c0_48 = arith.constant 0 : index
    %c0_49 = arith.constant 0 : index
    %138 = vector.load %arg12[%137, %c0_48, %c0_49] : memref<6x32x64xbf16, #tpu.memory_space<vmem>>, vector<1x32x64xbf16>
    %139 = vector.shape_cast %138 : vector<1x32x64xbf16> to vector<32x64xbf16>
    %c3_i32_50 = arith.constant 3 : i32
    %140 = arith.muli %arg1, %c3_i32_50 : i32
    %c2_i32 = arith.constant 2 : i32
    %141 = arith.addi %140, %c2_i32 : i32
    %142 = arith.index_cast %141 : i32 to index
    %c0_51 = arith.constant 0 : index
    %c0_52 = arith.constant 0 : index
    %143 = vector.load %arg12[%142, %c0_51, %c0_52] : memref<6x32x64xbf16, #tpu.memory_space<vmem>>, vector<1x32x64xbf16>
    %144 = vector.shape_cast %143 : vector<1x32x64xbf16> to vector<32x64xbf16>
    %145 = arith.index_cast %arg1 : i32 to index
    %c0_53 = arith.constant 0 : index
    %c0_54 = arith.constant 0 : index
    %146 = vector.load %arg13[%145, %c0_53, %c0_54] : memref<2x1x64xf32, #tpu.memory_space<vmem>>, vector<1x1x64xf32>
    %147 = vector.shape_cast %146 : vector<1x1x64xf32> to vector<1x64xf32>
    %148 = tpu.iota {dimensions = array<i32: 0>} : vector<8x1xi32>
    %cst_55 = arith.constant 0.000000e+00 : f32
    %149 = vector.broadcast %cst_55 : f32 to vector<8x64xf32>
    %c1_i32_56 = arith.constant 1 : i32
    %150 = tpu.dynamic_rotate %129 by %c1_i32_56 dim 0 : vector<8x32xf32>, i32 -> vector<8x32xf32>
    %c1_i32_57 = arith.constant 1 : i32
    %151 = vector.broadcast %c1_i32_57 : i32 to vector<8x1xi32>
    %152 = arith.cmpi sge, %148, %151 : vector<8x1xi32>
    %cst_58 = arith.constant 0.000000e+00 : f32
    %153 = vector.shape_cast %152 : vector<8x1xi1> to vector<8x1xi1>
    %154 = vector.broadcast %153 : vector<8x1xi1> to vector<8x32xi1>
    %155 = vector.broadcast %cst_58 : f32 to vector<8x32xf32>
    %156 = arith.select %154, %150, %155 : vector<8x32xi1>, vector<8x32xf32>
    %157 = arith.truncf %156 : vector<8x32xf32> to vector<8x32xbf16>
    %cst_59 = arith.constant dense<0.000000e+00> : vector<8x64xf32>
    %158 = tpu.matmul %157, %134, %cst_59 {dimension_numbers = #tpu.dot_dimension_numbers<[1], [0], [0], [1], [0, 0, 1, 1], [], []>} : vector<8x32xbf16>, vector<32x64xbf16>, vector<8x64xf32> -> vector<8x64xf32>
    %159 = arith.addf %149, %158 : vector<8x64xf32>
    %160 = arith.truncf %129 : vector<8x32xf32> to vector<8x32xbf16>
    %cst_60 = arith.constant dense<0.000000e+00> : vector<8x64xf32>
    %161 = tpu.matmul %160, %139, %cst_60 {dimension_numbers = #tpu.dot_dimension_numbers<[1], [0], [0], [1], [0, 0, 1, 1], [], []>} : vector<8x32xbf16>, vector<32x64xbf16>, vector<8x64xf32> -> vector<8x64xf32>
    %162 = arith.addf %159, %161 : vector<8x64xf32>
    %c7_i32 = arith.constant 7 : i32
    %163 = tpu.dynamic_rotate %129 by %c7_i32 dim 0 : vector<8x32xf32>, i32 -> vector<8x32xf32>
    %c7_i32_61 = arith.constant 7 : i32
    %164 = vector.broadcast %c7_i32_61 : i32 to vector<8x1xi32>
    %165 = arith.cmpi slt, %148, %164 : vector<8x1xi32>
    %cst_62 = arith.constant 0.000000e+00 : f32
    %166 = vector.shape_cast %165 : vector<8x1xi1> to vector<8x1xi1>
    %167 = vector.broadcast %166 : vector<8x1xi1> to vector<8x32xi1>
    %168 = vector.broadcast %cst_62 : f32 to vector<8x32xf32>
    %169 = arith.select %167, %163, %168 : vector<8x32xi1>, vector<8x32xf32>
    %170 = arith.truncf %169 : vector<8x32xf32> to vector<8x32xbf16>
    %cst_63 = arith.constant dense<0.000000e+00> : vector<8x64xf32>
    %171 = tpu.matmul %170, %144, %cst_63 {dimension_numbers = #tpu.dot_dimension_numbers<[1], [0], [0], [1], [0, 0, 1, 1], [], []>} : vector<8x32xbf16>, vector<32x64xbf16>, vector<8x64xf32> -> vector<8x64xf32>
    %172 = arith.addf %162, %171 : vector<8x64xf32>
    %173 = vector.broadcast %147 : vector<1x64xf32> to vector<8x64xf32>
    %174 = arith.addf %172, %173 : vector<8x64xf32>
    %cst_64 = arith.constant 0.000000e+00 : f32
    %175 = vector.broadcast %cst_64 : f32 to vector<8x64xf32>
    %176 = arith.maximumf %174, %175 : vector<8x64xf32>
    %c3_i32_65 = arith.constant 3 : i32
    %177 = arith.muli %arg1, %c3_i32_65 : i32
    %c0_i32_66 = arith.constant 0 : i32
    %178 = arith.addi %177, %c0_i32_66 : i32
    %179 = arith.index_cast %178 : i32 to index
    %c0_67 = arith.constant 0 : index
    %c0_68 = arith.constant 0 : index
    %180 = vector.load %arg14[%179, %c0_67, %c0_68] : memref<6x64x32xbf16, #tpu.memory_space<vmem>>, vector<1x64x32xbf16>
    %181 = vector.shape_cast %180 : vector<1x64x32xbf16> to vector<64x32xbf16>
    %c3_i32_69 = arith.constant 3 : i32
    %182 = arith.muli %arg1, %c3_i32_69 : i32
    %c1_i32_70 = arith.constant 1 : i32
    %183 = arith.addi %182, %c1_i32_70 : i32
    %184 = arith.index_cast %183 : i32 to index
    %c0_71 = arith.constant 0 : index
    %c0_72 = arith.constant 0 : index
    %185 = vector.load %arg14[%184, %c0_71, %c0_72] : memref<6x64x32xbf16, #tpu.memory_space<vmem>>, vector<1x64x32xbf16>
    %186 = vector.shape_cast %185 : vector<1x64x32xbf16> to vector<64x32xbf16>
    %c3_i32_73 = arith.constant 3 : i32
    %187 = arith.muli %arg1, %c3_i32_73 : i32
    %c2_i32_74 = arith.constant 2 : i32
    %188 = arith.addi %187, %c2_i32_74 : i32
    %189 = arith.index_cast %188 : i32 to index
    %c0_75 = arith.constant 0 : index
    %c0_76 = arith.constant 0 : index
    %190 = vector.load %arg14[%189, %c0_75, %c0_76] : memref<6x64x32xbf16, #tpu.memory_space<vmem>>, vector<1x64x32xbf16>
    %191 = vector.shape_cast %190 : vector<1x64x32xbf16> to vector<64x32xbf16>
    %192 = arith.index_cast %arg1 : i32 to index
    %c0_77 = arith.constant 0 : index
    %c0_78 = arith.constant 0 : index
    %193 = vector.load %arg15[%192, %c0_77, %c0_78] : memref<2x1x32xf32, #tpu.memory_space<vmem>>, vector<1x1x32xf32>
    %194 = vector.shape_cast %193 : vector<1x1x32xf32> to vector<1x32xf32>
    %195 = tpu.iota {dimensions = array<i32: 0>} : vector<8x1xi32>
    %cst_79 = arith.constant 0.000000e+00 : f32
    %196 = vector.broadcast %cst_79 : f32 to vector<8x32xf32>
    %c1_i32_80 = arith.constant 1 : i32
    %197 = tpu.dynamic_rotate %176 by %c1_i32_80 dim 0 : vector<8x64xf32>, i32 -> vector<8x64xf32>
    %c1_i32_81 = arith.constant 1 : i32
    %198 = vector.broadcast %c1_i32_81 : i32 to vector<8x1xi32>
    %199 = arith.cmpi sge, %195, %198 : vector<8x1xi32>
    %cst_82 = arith.constant 0.000000e+00 : f32
    %200 = vector.shape_cast %199 : vector<8x1xi1> to vector<8x1xi1>
    %201 = vector.broadcast %200 : vector<8x1xi1> to vector<8x64xi1>
    %202 = vector.broadcast %cst_82 : f32 to vector<8x64xf32>
    %203 = arith.select %201, %197, %202 : vector<8x64xi1>, vector<8x64xf32>
    %204 = arith.truncf %203 : vector<8x64xf32> to vector<8x64xbf16>
    %cst_83 = arith.constant dense<0.000000e+00> : vector<8x32xf32>
    %205 = tpu.matmul %204, %181, %cst_83 {dimension_numbers = #tpu.dot_dimension_numbers<[1], [0], [0], [1], [0, 0, 1, 1], [], []>} : vector<8x64xbf16>, vector<64x32xbf16>, vector<8x32xf32> -> vector<8x32xf32>
    %206 = arith.addf %196, %205 : vector<8x32xf32>
    %207 = arith.truncf %176 : vector<8x64xf32> to vector<8x64xbf16>
    %cst_84 = arith.constant dense<0.000000e+00> : vector<8x32xf32>
    %208 = tpu.matmul %207, %186, %cst_84 {dimension_numbers = #tpu.dot_dimension_numbers<[1], [0], [0], [1], [0, 0, 1, 1], [], []>} : vector<8x64xbf16>, vector<64x32xbf16>, vector<8x32xf32> -> vector<8x32xf32>
    %209 = arith.addf %206, %208 : vector<8x32xf32>
    %c7_i32_85 = arith.constant 7 : i32
    %210 = tpu.dynamic_rotate %176 by %c7_i32_85 dim 0 : vector<8x64xf32>, i32 -> vector<8x64xf32>
    %c7_i32_86 = arith.constant 7 : i32
    %211 = vector.broadcast %c7_i32_86 : i32 to vector<8x1xi32>
    %212 = arith.cmpi slt, %195, %211 : vector<8x1xi32>
    %cst_87 = arith.constant 0.000000e+00 : f32
    %213 = vector.shape_cast %212 : vector<8x1xi1> to vector<8x1xi1>
    %214 = vector.broadcast %213 : vector<8x1xi1> to vector<8x64xi1>
    %215 = vector.broadcast %cst_87 : f32 to vector<8x64xf32>
    %216 = arith.select %214, %210, %215 : vector<8x64xi1>, vector<8x64xf32>
    %217 = arith.truncf %216 : vector<8x64xf32> to vector<8x64xbf16>
    %cst_88 = arith.constant dense<0.000000e+00> : vector<8x32xf32>
    %218 = tpu.matmul %217, %191, %cst_88 {dimension_numbers = #tpu.dot_dimension_numbers<[1], [0], [0], [1], [0, 0, 1, 1], [], []>} : vector<8x64xbf16>, vector<64x32xbf16>, vector<8x32xf32> -> vector<8x32xf32>
    %219 = arith.addf %209, %218 : vector<8x32xf32>
    %220 = vector.broadcast %194 : vector<1x32xf32> to vector<8x32xf32>
    %221 = arith.addf %219, %220 : vector<8x32xf32>
    %222 = arith.addf %103, %221 : vector<8x32xf32>
    %c0_89 = arith.constant 0 : index
    %c0_90 = arith.constant 0 : index
    %223 = vector.load %arg25[%c0_89, %c0_90] : memref<8x32xf32, #tpu.memory_space<vmem>>, vector<8x32xf32>
    tpu.vector_store %arg25[%c0_89, %c0_90], %222 {strides = array<i32>} : memref<8x32xf32, #tpu.memory_space<vmem>>, vector<8x32xf32>,
    %c1_i32_91 = arith.constant 1 : i32
    %224 = arith.cmpi eq, %arg1, %c1_i32_91 : i32
    %225 = arith.extui %224 : i1 to i32
    %c0_i32_92 = arith.constant 0 : i32
    %226 = arith.cmpi ne, %225, %c0_i32_92 : i32
    scf.if %226 {
      %c0_93 = arith.constant 0 : index
      %c0_94 = arith.constant 0 : index
      %227 = vector.load %arg16[%c0_93, %c0_94] : memref<1x32xf32, #tpu.memory_space<vmem>>, vector<1x32xf32>
      %c0_95 = arith.constant 0 : index
      %c0_96 = arith.constant 0 : index
      %228 = vector.load %arg17[%c0_95, %c0_96] : memref<1x32xf32, #tpu.memory_space<vmem>>, vector<1x32xf32>
      %cst_97 = arith.constant dense<0.000000e+00> : vector<8xf32>
      %229 = vector.multi_reduction <add>, %222, %cst_97 [1] : vector<8x32xf32> to vector<8xf32>
      %230 = vector.shape_cast %229 : vector<8xf32> to vector<8x1xf32>
      %cst_98 = arith.constant 3.200000e+01 : f32
      %231 = vector.broadcast %cst_98 : f32 to vector<8x1xf32>
      %232 = arith.divf %230, %231 : vector<8x1xf32>
      %233 = vector.broadcast %232 : vector<8x1xf32> to vector<8x32xf32>
      %234 = arith.subf %222, %233 : vector<8x32xf32>
      %235 = arith.mulf %234, %234 : vector<8x32xf32>
      %cst_99 = arith.constant dense<0.000000e+00> : vector<8xf32>
      %236 = vector.multi_reduction <add>, %235, %cst_99 [1] : vector<8x32xf32> to vector<8xf32>
      %237 = vector.shape_cast %236 : vector<8xf32> to vector<8x1xf32>
      %cst_100 = arith.constant 3.200000e+01 : f32
      %238 = vector.broadcast %cst_100 : f32 to vector<8x1xf32>
      %239 = arith.divf %237, %238 : vector<8x1xf32>
      %cst_101 = arith.constant 9.99999996E-13 : f32
      %240 = vector.broadcast %cst_101 : f32 to vector<8x1xf32>
      %241 = arith.addf %239, %240 : vector<8x1xf32>
      %242 = math.rsqrt %241 : vector<8x1xf32>
      %243 = vector.broadcast %242 : vector<8x1xf32> to vector<8x32xf32>
      %244 = arith.mulf %234, %243 : vector<8x32xf32>
      %245 = vector.broadcast %227 : vector<1x32xf32> to vector<8x32xf32>
      %246 = arith.mulf %244, %245 : vector<8x32xf32>
      %247 = vector.broadcast %228 : vector<1x32xf32> to vector<8x32xf32>
      %248 = arith.addf %246, %247 : vector<8x32xf32>
      %c0_102 = arith.constant 0 : index
      %c0_103 = arith.constant 0 : index
      %c0_104 = arith.constant 0 : index
      %249 = vector.load %arg22[%c0_102, %c0_103, %c0_104] : memref<1x8x32xf32, #tpu.memory_space<vmem>>, vector<1x8x32xf32>
      %250 = vector.shape_cast %249 : vector<1x8x32xf32> to vector<8x32xf32>
      %251 = vector.shape_cast %248 : vector<8x32xf32> to vector<1x8x32xf32>
      tpu.vector_store %arg22[%c0_102, %c0_103, %c0_104], %251 {strides = array<i32>} : memref<1x8x32xf32, #tpu.memory_space<vmem>>, vector<1x8x32xf32>,
      %252 = tpu.iota {dimensions = array<i32: 0>} : vector<8x1xi32>
      %253 = vector.broadcast %1 : i32 to vector<8x1xi32>
      %254 = arith.cmpi slt, %252, %253 : vector<8x1xi32>
      %c0_105 = arith.constant 0 : index
      %c0_106 = arith.constant 0 : index
      %255 = vector.load %arg18[%c0_105, %c0_106] : memref<32x32xbf16, #tpu.memory_space<vmem>>, vector<32x32xbf16>
      %256 = arith.truncf %248 : vector<8x32xf32> to vector<8x32xbf16>
      %cst_107 = arith.constant dense<0.000000e+00> : vector<8x32xf32>
      %257 = tpu.matmul %256, %255, %cst_107 {dimension_numbers = #tpu.dot_dimension_numbers<[1], [0], [0], [1], [0, 0, 1, 1], [], []>} : vector<8x32xbf16>, vector<32x32xbf16>, vector<8x32xf32> -> vector<8x32xf32>
      %c0_108 = arith.constant 0 : index
      %c0_109 = arith.constant 0 : index
      %258 = vector.load %arg19[%c0_108, %c0_109] : memref<1x32xf32, #tpu.memory_space<vmem>>, vector<1x32xf32>
      %259 = vector.broadcast %258 : vector<1x32xf32> to vector<8x32xf32>
      %260 = arith.addf %257, %259 : vector<8x32xf32>
      %c0_110 = arith.constant 0 : index
      %c0_111 = arith.constant 0 : index
      %261 = vector.load %arg20[%c0_110, %c0_111] : memref<32x32xbf16, #tpu.memory_space<vmem>>, vector<32x32xbf16>
      %262 = arith.truncf %248 : vector<8x32xf32> to vector<8x32xbf16>
      %cst_112 = arith.constant dense<0.000000e+00> : vector<8x32xf32>
      %263 = tpu.matmul %262, %261, %cst_112 {dimension_numbers = #tpu.dot_dimension_numbers<[1], [0], [0], [1], [0, 0, 1, 1], [], []>} : vector<8x32xbf16>, vector<32x32xbf16>, vector<8x32xf32> -> vector<8x32xf32>
      %c0_113 = arith.constant 0 : index
      %c0_114 = arith.constant 0 : index
      %264 = vector.load %arg21[%c0_113, %c0_114] : memref<1x32xf32, #tpu.memory_space<vmem>>, vector<1x32xf32>
      %265 = vector.broadcast %264 : vector<1x32xf32> to vector<8x32xf32>
      %266 = arith.addf %263, %265 : vector<8x32xf32>
      %cst_115 = arith.constant 0.000000e+00 : f32
      %267 = vector.shape_cast %254 : vector<8x1xi1> to vector<8x1xi1>
      %268 = vector.broadcast %267 : vector<8x1xi1> to vector<8x32xi1>
      %269 = vector.broadcast %cst_115 : f32 to vector<8x32xf32>
      %270 = arith.select %268, %260, %269 : vector<8x32xi1>, vector<8x32xf32>
      %c0_116 = arith.constant 0 : index
      %c0_117 = arith.constant 0 : index
      %c0_118 = arith.constant 0 : index
      %271 = vector.load %arg23[%c0_116, %c0_117, %c0_118] : memref<1x8x32xf32, #tpu.memory_space<vmem>>, vector<1x8x32xf32>
      %272 = vector.shape_cast %271 : vector<1x8x32xf32> to vector<8x32xf32>
      %273 = vector.shape_cast %270 : vector<8x32xf32> to vector<1x8x32xf32>
      tpu.vector_store %arg23[%c0_116, %c0_117, %c0_118], %273 {strides = array<i32>} : memref<1x8x32xf32, #tpu.memory_space<vmem>>, vector<1x8x32xf32>,
      %cst_119 = arith.constant 0.000000e+00 : f32
      %274 = vector.shape_cast %254 : vector<8x1xi1> to vector<8x1xi1>
      %275 = vector.broadcast %274 : vector<8x1xi1> to vector<8x32xi1>
      %276 = vector.broadcast %cst_119 : f32 to vector<8x32xf32>
      %277 = arith.select %275, %266, %276 : vector<8x32xi1>, vector<8x32xf32>
      %c0_120 = arith.constant 0 : index
      %c0_121 = arith.constant 0 : index
      %c0_122 = arith.constant 0 : index
      %278 = vector.load %arg24[%c0_120, %c0_121, %c0_122] : memref<1x8x32xf32, #tpu.memory_space<vmem>>, vector<1x8x32xf32>
      %279 = vector.shape_cast %278 : vector<1x8x32xf32> to vector<8x32xf32>
      %280 = vector.shape_cast %277 : vector<8x32xf32> to vector<1x8x32xf32>
      tpu.vector_store %arg24[%c0_120, %c0_121, %c0_122], %280 {strides = array<i32>} : memref<1x8x32xf32, #tpu.memory_space<vmem>>, vector<1x8x32xf32>,
    } else {
    }
    return
  }
  func.func @transform_0(%arg0: i32, %arg1: i32, %arg2: memref<2xi32, #tpu.memory_space<smem>>) -> (i32, i32, i32) {
    %c0_i32 = arith.constant 0 : i32
    %c0_i32_0 = arith.constant 0 : i32
    %c0_i32_1 = arith.constant 0 : i32
    return %arg0, %c0_i32, %c0_i32_0 : i32, i32, i32
  }
  func.func @transform_1(%arg0: i32, %arg1: i32, %arg2: memref<2xi32, #tpu.memory_space<smem>>) -> (i32, i32, i32) {
    %c0_i32 = arith.constant 0 : i32
    %c0_i32_0 = arith.constant 0 : i32
    %c0_i32_1 = arith.constant 0 : i32
    %c0_i32_2 = arith.constant 0 : i32
    return %c0_i32, %c0_i32_0, %c0_i32_1 : i32, i32, i32
  }
  func.func @transform_2(%arg0: i32, %arg1: i32, %arg2: memref<2xi32, #tpu.memory_space<smem>>) -> (i32, i32, i32) {
    %c0_i32 = arith.constant 0 : i32
    %c0_i32_0 = arith.constant 0 : i32
    %c0_i32_1 = arith.constant 0 : i32
    %c0_i32_2 = arith.constant 0 : i32
    return %c0_i32, %c0_i32_0, %c0_i32_1 : i32, i32, i32
  }
  func.func @transform_3(%arg0: i32, %arg1: i32, %arg2: memref<2xi32, #tpu.memory_space<smem>>) -> (i32, i32, i32) {
    %c0_i32 = arith.constant 0 : i32
    %c0_i32_0 = arith.constant 0 : i32
    %c0_i32_1 = arith.constant 0 : i32
    %c0_i32_2 = arith.constant 0 : i32
    return %c0_i32, %c0_i32_0, %c0_i32_1 : i32, i32, i32
  }
  func.func @transform_4(%arg0: i32, %arg1: i32, %arg2: memref<2xi32, #tpu.memory_space<smem>>) -> (i32, i32, i32) {
    %c0_i32 = arith.constant 0 : i32
    %c0_i32_0 = arith.constant 0 : i32
    %c0_i32_1 = arith.constant 0 : i32
    %c0_i32_2 = arith.constant 0 : i32
    return %c0_i32, %c0_i32_0, %c0_i32_1 : i32, i32, i32
  }
  func.func @transform_5(%arg0: i32, %arg1: i32, %arg2: memref<2xi32, #tpu.memory_space<smem>>) -> (i32, i32, i32) {
    %c0_i32 = arith.constant 0 : i32
    %c0_i32_0 = arith.constant 0 : i32
    %c0_i32_1 = arith.constant 0 : i32
    %c0_i32_2 = arith.constant 0 : i32
    return %c0_i32, %c0_i32_0, %c0_i32_1 : i32, i32, i32
  }
  func.func @transform_6(%arg0: i32, %arg1: i32, %arg2: memref<2xi32, #tpu.memory_space<smem>>) -> (i32, i32, i32) {
    %c0_i32 = arith.constant 0 : i32
    %c0_i32_0 = arith.constant 0 : i32
    %c0_i32_1 = arith.constant 0 : i32
    %c0_i32_2 = arith.constant 0 : i32
    return %c0_i32, %c0_i32_0, %c0_i32_1 : i32, i32, i32
  }
  func.func @transform_7(%arg0: i32, %arg1: i32, %arg2: memref<2xi32, #tpu.memory_space<smem>>) -> (i32, i32, i32) {
    %c0_i32 = arith.constant 0 : i32
    %c0_i32_0 = arith.constant 0 : i32
    %c0_i32_1 = arith.constant 0 : i32
    %c0_i32_2 = arith.constant 0 : i32
    return %c0_i32, %c0_i32_0, %c0_i32_1 : i32, i32, i32
  }
  func.func @transform_8(%arg0: i32, %arg1: i32, %arg2: memref<2xi32, #tpu.memory_space<smem>>) -> (i32, i32, i32) {
    %c0_i32 = arith.constant 0 : i32
    %c0_i32_0 = arith.constant 0 : i32
    %c0_i32_1 = arith.constant 0 : i32
    %c0_i32_2 = arith.constant 0 : i32
    return %c0_i32, %c0_i32_0, %c0_i32_1 : i32, i32, i32
  }
  func.func @transform_9(%arg0: i32, %arg1: i32, %arg2: memref<2xi32, #tpu.memory_space<smem>>) -> (i32, i32, i32) {
    %c0_i32 = arith.constant 0 : i32
    %c0_i32_0 = arith.constant 0 : i32
    %c0_i32_1 = arith.constant 0 : i32
    %c0_i32_2 = arith.constant 0 : i32
    return %c0_i32, %c0_i32_0, %c0_i32_1 : i32, i32, i32
  }
  func.func @transform_10(%arg0: i32, %arg1: i32, %arg2: memref<2xi32, #tpu.memory_space<smem>>) -> (i32, i32, i32) {
    %c0_i32 = arith.constant 0 : i32
    %c0_i32_0 = arith.constant 0 : i32
    %c0_i32_1 = arith.constant 0 : i32
    %c0_i32_2 = arith.constant 0 : i32
    return %c0_i32, %c0_i32_0, %c0_i32_1 : i32, i32, i32
  }
  func.func @transform_11(%arg0: i32, %arg1: i32, %arg2: memref<2xi32, #tpu.memory_space<smem>>) -> (i32, i32, i32) {
    %c0_i32 = arith.constant 0 : i32
    %c0_i32_0 = arith.constant 0 : i32
    %c0_i32_1 = arith.constant 0 : i32
    %c0_i32_2 = arith.constant 0 : i32
    return %c0_i32, %c0_i32_0, %c0_i32_1 : i32, i32, i32
  }
  func.func @transform_12(%arg0: i32, %arg1: i32, %arg2: memref<2xi32, #tpu.memory_space<smem>>) -> (i32, i32, i32) {
    %c0_i32 = arith.constant 0 : i32
    %c0_i32_0 = arith.constant 0 : i32
    %c0_i32_1 = arith.constant 0 : i32
    %c0_i32_2 = arith.constant 0 : i32
    return %c0_i32, %c0_i32_0, %c0_i32_1 : i32, i32, i32
  }
  func.func @transform_13(%arg0: i32, %arg1: i32, %arg2: memref<2xi32, #tpu.memory_space<smem>>) -> (i32, i32) {
    %c0_i32 = arith.constant 0 : i32
    %c0_i32_0 = arith.constant 0 : i32
    %c0_i32_1 = arith.constant 0 : i32
    return %c0_i32, %c0_i32_0 : i32, i32
  }
  func.func @transform_14(%arg0: i32, %arg1: i32, %arg2: memref<2xi32, #tpu.memory_space<smem>>) -> (i32, i32) {
    %c0_i32 = arith.constant 0 : i32
    %c0_i32_0 = arith.constant 0 : i32
    %c0_i32_1 = arith.constant 0 : i32
    return %c0_i32, %c0_i32_0 : i32, i32
  }
  func.func @transform_15(%arg0: i32, %arg1: i32, %arg2: memref<2xi32, #tpu.memory_space<smem>>) -> (i32, i32) {
    %c0_i32 = arith.constant 0 : i32
    %c0_i32_0 = arith.constant 0 : i32
    %c0_i32_1 = arith.constant 0 : i32
    return %c0_i32, %c0_i32_0 : i32, i32
  }
  func.func @transform_16(%arg0: i32, %arg1: i32, %arg2: memref<2xi32, #tpu.memory_space<smem>>) -> (i32, i32) {
    %c0_i32 = arith.constant 0 : i32
    %c0_i32_0 = arith.constant 0 : i32
    %c0_i32_1 = arith.constant 0 : i32
    return %c0_i32, %c0_i32_0 : i32, i32
  }
  func.func @transform_17(%arg0: i32, %arg1: i32, %arg2: memref<2xi32, #tpu.memory_space<smem>>) -> (i32, i32) {
    %c0_i32 = arith.constant 0 : i32
    %c0_i32_0 = arith.constant 0 : i32
    %c0_i32_1 = arith.constant 0 : i32
    return %c0_i32, %c0_i32_0 : i32, i32
  }
  func.func @transform_18(%arg0: i32, %arg1: i32, %arg2: memref<2xi32, #tpu.memory_space<smem>>) -> (i32, i32) {
    %c0_i32 = arith.constant 0 : i32
    %c0_i32_0 = arith.constant 0 : i32
    %c0_i32_1 = arith.constant 0 : i32
    return %c0_i32, %c0_i32_0 : i32, i32
  }
  func.func @transform_19(%arg0: i32, %arg1: i32, %arg2: memref<2xi32, #tpu.memory_space<smem>>) -> (i32, i32, i32) {
    %c0_i32 = arith.constant 0 : i32
    %c0_i32_0 = arith.constant 0 : i32
    %c0_i32_1 = arith.constant 0 : i32
    return %arg0, %c0_i32, %c0_i32_0 : i32, i32, i32
  }
  func.func @transform_20(%arg0: i32, %arg1: i32, %arg2: memref<2xi32, #tpu.memory_space<smem>>) -> (i32, i32, i32) {
    %c0_i32 = arith.constant 0 : i32
    %c0_i32_0 = arith.constant 0 : i32
    %c0_i32_1 = arith.constant 0 : i32
    return %arg0, %c0_i32, %c0_i32_0 : i32, i32, i32
  }
  func.func @transform_21(%arg0: i32, %arg1: i32, %arg2: memref<2xi32, #tpu.memory_space<smem>>) -> (i32, i32, i32) {
    %c0_i32 = arith.constant 0 : i32
    %c0_i32_0 = arith.constant 0 : i32
    %c0_i32_1 = arith.constant 0 : i32
    return %arg0, %c0_i32, %c0_i32_0 : i32, i32, i32
  }
}

</mosaic_0001>

<llo_original>
// kernel: onnx_text_encoder.1
$region0: #{onnx_text_encoder.1}
  #allocation0 [shape = 'u32[]', space=smem, size = 0x4, offset = 0x4, fixed_abs, tag = 'smem constant byte address 0x4 - core index']
  #allocation1 [shape = 'u32[144,128]{1,0:T(1,128)}', space=vmem, size = 0x12000, scoped, tag = 'internal scratch']
  #allocation2 [shape = 'f32[8,32]{1,0:T(8,128)}', space=vmem, size = 0x1000, scoped, tag = 'scratch operand']
  #allocation3 [shape = 'f32[8,32]{1,0:T(8,128)}', space=vmem, size = 0x1000, scoped, tag = 'scratch operand']
  #allocation4 [shape = 's32[1]{0}', space=sflag, size = 0x4, scoped, tag = 'scoped memory for onnx_text_encoder.1']
  #allocation5 [shape = 'u8[512]{0}', space=smem, size = 0x200, scoped, tag = 'prefetched SMEM operand 0']
  %s0 = inlined_call_operand.vmem [shape: s32[2], index: 0, kind: input, shape index: {}]
  %s1 = inlined_call_operand.vmem [shape: f32[2,8,32], index: 1, kind: input, shape index: {}]
  %s2 = inlined_call_operand.vmem [shape: f32[2,1,32], index: 2, kind: input, shape index: {}]
  %s3 = inlined_call_operand.vmem [shape: f32[2,1,32], index: 3, kind: input, shape index: {}]
  %s4 = inlined_call_operand.vmem [shape: bf16[2,32,96], index: 4, kind: input, shape index: {}]
  %s5 = inlined_call_operand.vmem [shape: f32[2,1,96], index: 5, kind: input, shape index: {}]
  %s6 = inlined_call_operand.vmem [shape: bf16[2,32,32], index: 6, kind: input, shape index: {}]
  %s7 = inlined_call_operand.vmem [shape: f32[2,1,32], index: 7, kind: input, shape index: {}]
  %s8 = inlined_call_operand.vmem [shape: f32[2,1,32], index: 8, kind: input, shape index: {}]
  %s9 = inlined_call_operand.vmem [shape: f32[2,1,32], index: 9, kind: input, shape index: {}]
  %s10 = inlined_call_operand.vmem [shape: bf16[6,32,64], index: 10, kind: input, shape index: {}]
  %s11 = inlined_call_operand.vmem [shape: f32[2,1,64], index: 11, kind: input, shape index: {}]
  %s12 = inlined_call_operand.vmem [shape: bf16[6,64,32], index: 12, kind: input, shape index: {}]
  %s13 = inlined_call_operand.vmem [shape: f32[2,1,32], index: 13, kind: input, shape index: {}]
  %s14 = inlined_call_operand.vmem [shape: f32[1,32], index: 14, kind: input, shape index: {}]
  %s15 = inlined_call_operand.vmem [shape: f32[1,32], index: 15, kind: input, shape index: {}]
  %s16 = inlined_call_operand.vmem [shape: bf16[32,32], index: 16, kind: input, shape index: {}]
  %s17 = inlined_call_operand.vmem [shape: f32[1,32], index: 17, kind: input, shape index: {}]
  %s18 = inlined_call_operand.vmem [shape: bf16[32,32], index: 18, kind: input, shape index: {}]
  %s19 = inlined_call_operand.vmem [shape: f32[1,32], index: 19, kind: input, shape index: {}]
  %s20 = inlined_call_operand.hbm [shape: f32[2,8,32], index: 20, kind: output, shape index: {0}]
  %s21 = inlined_call_operand.hbm [shape: f32[2,8,32], index: 21, kind: output, shape index: {1}]
  %s22 = inlined_call_operand.hbm [shape: f32[2,8,32], index: 22, kind: output, shape index: {2}]
  %23 = xla_tuple %s20, %s21, %s22
  %s24 = sld [smem:[#allocation0]]
  $region133: #{onnx_text_encoder.1} parent=0
    _
  %s26 = ssub.s32 1, %s24
  %s27 = scalar_select 0, %s26, %s24
  %s28 = sshll.u32 %s0, 4
  %s29 = int_to_ptr.vmem [resolvable:$true] %s28
  %31 = dma.vmem_to_smem %s29, 16, [#allocation5], [#allocation4]
  %32 = dma.done [#allocation4], 16
  %33 = sfence
  $region1: #{onnx_text_encoder.1} parent=0
    #allocation6 [shape = 'u8[8192]{0}', space=vmem, size = 0x2000, scoped, tag = 'output window, operand 0']
    #allocation7 [shape = 's32[2]{0}', space=sflag, size = 0x8, scoped, tag = 'scoped memory for onnx_text_encoder.1']
    #allocation8 [shape = 'u8[8192]{0}', space=vmem, size = 0x2000, scoped, tag = 'output window, operand 1']
    #allocation9 [shape = 's32[2]{0}', space=sflag, size = 0x8, scoped, tag = 'scoped memory for onnx_text_encoder.1']
    #allocation10 [shape = 'u8[8192]{0}', space=vmem, size = 0x2000, scoped, tag = 'output window, operand 2']
    %34 = vsyncpa [#allocation7], 0
    %s35 = scalar_lea.sflag [#allocation7], 1
    %36 = vsyncpa %s35, 0
    %37 = vsyncpa [#allocation9], 0
    %s38 = scalar_lea.sflag [#allocation9], 1
    %39 = vsyncpa %s38, 0
    loop: start=0, step=1, limit=6
    $region2: #{onnx_text_encoder.1} parent=1 // loop_pre_header
      _
    $region3: #{onnx_text_encoder.1} parent=1 // loop_header
      %s41 = sphi 0, %s45
      %p42 = scmp.ge.s32.totalorder %s41, 6
      %s48 = sphi 0, %s60
      %s49 = sphi 0, %s56
      %s50 = sphi 0, %s48
      %s51 = sphi 0, %s49
      %s52 = sphi 0, %s50
      %s53 = sphi 0, %s51
      %s63 = sphi 0, %s65
      %s66 = sphi 0, %s63
      %s67 = sphi 0, %s66
      %s83 = sphi 0, %s67
      %s87 = sphi 0, %s87
      %s89 = sphi 0, %s87
      %s90 = sphi 0, %s89
      %s104 = sphi 0, %s90
      %s108 = sphi 0, %s108
      %s110 = sphi 0, %s108
      %s111 = sphi 0, %s110
      %s125 = sphi 0, %s111
      %s129 = sphi 0, %s129
      %s131 = sphi 0, %s129
      %s132 = sphi 0, %s131
      %s146 = sphi 0, %s132
      %s150 = sphi 0, %s150
      %s152 = sphi 0, %s150
      %s153 = sphi 0, %s152
      %s167 = sphi 0, %s153
      %s171 = sphi 0, %s171
      %s173 = sphi 0, %s171
      %s174 = sphi 0, %s173
      %s188 = sphi 0, %s174
      %s192 = sphi 0, %s192
      %s194 = sphi 0, %s192
      %s195 = sphi 0, %s194
      %s209 = sphi 0, %s195
      %s213 = sphi 0, %s213
      %s215 = sphi 0, %s213
      %s216 = sphi 0, %s215
      %s230 = sphi 0, %s216
      %s234 = sphi 0, %s234
      %s236 = sphi 0, %s234
      %s237 = sphi 0, %s236
      %s251 = sphi 0, %s237
      %s255 = sphi 0, %s255
      %s257 = sphi 0, %s255
      %s258 = sphi 0, %s257
      %s272 = sphi 0, %s258
      %s276 = sphi 0, %s276
      %s278 = sphi 0, %s276
      %s279 = sphi 0, %s278
      %s293 = sphi 0, %s279
      %s297 = sphi 0, %s297
      %s299 = sphi 0, %s297
      %s300 = sphi 0, %s299
      %s314 = sphi 0, %s300
      %s318 = sphi 0, %s318
      %s320 = sphi 0, %s318
      %s321 = sphi 0, %s320
      %s335 = sphi 0, %s321
      %s339 = sphi 0, %s339
      %s341 = sphi 0, %s339
      %s342 = sphi 0, %s341
      %s356 = sphi 0, %s342
      %s360 = sphi 0, %s360
      %s362 = sphi 0, %s360
      %s363 = sphi 0, %s362
      %s377 = sphi 0, %s363
      %s381 = sphi 0, %s381
      %s383 = sphi 0, %s381
      %s384 = sphi 0, %s383
      %s398 = sphi 0, %s384
      %s402 = sphi 0, %s402
      %s404 = sphi 0, %s402
      %s405 = sphi 0, %s404
      %s419 = sphi 0, %s405
      %s423 = sphi 0, %s423
      %s425 = sphi 0, %s423
      %s426 = sphi 0, %s425
      %s440 = sphi 0, %s426
      %s444 = sphi 0, %s444
      %s446 = sphi 0, %s444
      %s447 = sphi 0, %s446
      %s461 = sphi 0, %s447
      %s467 = sphi 0, %s469
      %s470 = sphi 0, %s467
      %s471 = sphi 0, %s470
      %s487 = sphi 0, %s471
      %s493 = sphi 0, %s495
      %s496 = sphi 0, %s493
      %s497 = sphi 0, %s496
      %s513 = sphi 0, %s497
      %s519 = sphi 0, %s521
      %s522 = sphi 0, %s519
      %s523 = sphi 0, %s522
      %s539 = sphi 0, %s523
    $region4: #{onnx_text_encoder.1} parent=1 // loop_header_branch
      %44 = sbr.rel (%p42) target = $region8
    $region5: #{onnx_text_encoder.1} parent=1 // loop_body
      %s46 = ssub.s32 %s41, 1
      %s47 = ssub.s32 %s41, 2
      %s54 = sadd.s32 1, %s49
      %p55 = scmp.ge.s32.totalorder %s54, 2
      %s56 = scalar_select %p55, 0, %s54
      %s57 = sadd.s32 1, %s48
      %s58 = scalar_select %p55, %s57, %s48
      %p59 = scmp.ge.s32.totalorder %s58, 2
      %s60 = scalar_select %p59, 0, %s58
      %s61 = ssub.s32 %s48, %s60
      %p62 = scmp.eq.s32.totalorder %s61, 0
      %s64 = sadd.s32 %s63, 1
      %s65 = scalar_select %p62, %s63, %s64
      %p68 = pneg %p62
      %p69 = scmp.eq.s32.totalorder %s41, 3
      %p70 = por %p68, %p69
      %p71 = scmp.ne.s32.totalorder %s63, %s66
      %p72 = scmp.eq.s32.totalorder %s41, 0
      %p73 = por %p71, %p72
      %p74 = scmp.ne.s32.totalorder %s63, %s66
      %p75 = scmp.eq.s32.totalorder %s46, 3
      %p76 = por %p74, %p75
      %p77 = scmp.ne.s32.totalorder %s66, %s67
      %p78 = scmp.eq.s32.totalorder %s46, 0
      %p79 = por %p77, %p78
      %p80 = scmp.ne.s32.totalorder %s66, %s67
      %p81 = scmp.eq.s32.totalorder %s47, 3
      %p82 = por %p80, %p81
      %p84 = scmp.ne.s32.totalorder %s67, %s83
      %p85 = scmp.eq.s32.totalorder %s47, 0
      %p86 = por %p84, %p85
      %s88 = sadd.s32 %s87, 1
      %p91 = scmp.eq.s32.totalorder %s41, 3
      %p92 = scmp.ne.s32.totalorder %s87, %s89
      %p93 = scmp.eq.s32.totalorder %s41, 0
      %p94 = por %p92, %p93
      %p95 = scmp.ne.s32.totalorder %s87, %s89
      %p96 = scmp.eq.s32.totalorder %s46, 3
      %p97 = por %p95, %p96
      %p98 = scmp.ne.s32.totalorder %s89, %s90
      %p99 = scmp.eq.s32.totalorder %s46, 0
      %p100 = por %p98, %p99
      %p101 = scmp.ne.s32.totalorder %s89, %s90
      %p102 = scmp.eq.s32.totalorder %s47, 3
      %p103 = por %p101, %p102
      %p105 = scmp.ne.s32.totalorder %s90, %s104
      %p106 = scmp.eq.s32.totalorder %s47, 0
      %p107 = por %p105, %p106
      %s109 = sadd.s32 %s108, 1
      %p112 = scmp.eq.s32.totalorder %s41, 3
      %p113 = scmp.ne.s32.totalorder %s108, %s110
      %p114 = scmp.eq.s32.totalorder %s41, 0
      %p115 = por %p113, %p114
      %p116 = scmp.ne.s32.totalorder %s108, %s110
      %p117 = scmp.eq.s32.totalorder %s46, 3
      %p118 = por %p116, %p117
      %p119 = scmp.ne.s32.totalorder %s110, %s111
      %p120 = scmp.eq.s32.totalorder %s46, 0
      %p121 = por %p119, %p120
      %p122 = scmp.ne.s32.totalorder %s110, %s111
      %p123 = scmp.eq.s32.totalorder %s47, 3
      %p124 = por %p122, %p123
      %p126 = scmp.ne.s32.totalorder %s111, %s125
      %p127 = scmp.eq.s32.totalorder %s47, 0
      %p128 = por %p126, %p127
      %s130 = sadd.s32 %s129, 1
      %p133 = scmp.eq.s32.totalorder %s41, 3
      %p134 = scmp.ne.s32.totalorder %s129, %s131
      %p135 = scmp.eq.s32.totalorder %s41, 0
      %p136 = por %p134, %p135
      %p137 = scmp.ne.s32.totalorder %s129, %s131
      %p138 = scmp.eq.s32.totalorder %s46, 3
      %p139 = por %p137, %p138
      %p140 = scmp.ne.s32.totalorder %s131, %s132
      %p141 = scmp.eq.s32.totalorder %s46, 0
      %p142 = por %p140, %p141
      %p143 = scmp.ne.s32.totalorder %s131, %s132
      %p144 = scmp.eq.s32.totalorder %s47, 3
      %p145 = por %p143, %p144
      %p147 = scmp.ne.s32.totalorder %s132, %s146
      %p148 = scmp.eq.s32.totalorder %s47, 0
      %p149 = por %p147, %p148
      %s151 = sadd.s32 %s150, 1
      %p154 = scmp.eq.s32.totalorder %s41, 3
      %p155 = scmp.ne.s32.totalorder %s150, %s152
      %p156 = scmp.eq.s32.totalorder %s41, 0
      %p157 = por %p155, %p156
      %p158 = scmp.ne.s32.totalorder %s150, %s152
      %p159 = scmp.eq.s32.totalorder %s46, 3
      %p160 = por %p158, %p159
      %p161 = scmp.ne.s32.totalorder %s152, %s153
      %p162 = scmp.eq.s32.totalorder %s46, 0
      %p163 = por %p161, %p162
      %p164 = scmp.ne.s32.totalorder %s152, %s153
      %p165 = scmp.eq.s32.totalorder %s47, 3
      %p166 = por %p164, %p165
      %p168 = scmp.ne.s32.totalorder %s153, %s167
      %p169 = scmp.eq.s32.totalorder %s47, 0
      %p170 = por %p168, %p169
      %s172 = sadd.s32 %s171, 1
      %p175 = scmp.eq.s32.totalorder %s41, 3
      %p176 = scmp.ne.s32.totalorder %s171, %s173
      %p177 = scmp.eq.s32.totalorder %s41, 0
      %p178 = por %p176, %p177
      %p179 = scmp.ne.s32.totalorder %s171, %s173
      %p180 = scmp.eq.s32.totalorder %s46, 3
      %p181 = por %p179, %p180
      %p182 = scmp.ne.s32.totalorder %s173, %s174
      %p183 = scmp.eq.s32.totalorder %s46, 0
      %p184 = por %p182, %p183
      %p185 = scmp.ne.s32.totalorder %s173, %s174
      %p186 = scmp.eq.s32.totalorder %s47, 3
      %p187 = por %p185, %p186
      %p189 = scmp.ne.s32.totalorder %s174, %s188
      %p190 = scmp.eq.s32.totalorder %s47, 0
      %p191 = por %p189, %p190
      %s193 = sadd.s32 %s192, 1
      %p196 = scmp.eq.s32.totalorder %s41, 3
      %p197 = scmp.ne.s32.totalorder %s192, %s194
      %p198 = scmp.eq.s32.totalorder %s41, 0
      %p199 = por %p197, %p198
      %p200 = scmp.ne.s32.totalorder %s192, %s194
      %p201 = scmp.eq.s32.totalorder %s46, 3
      %p202 = por %p200, %p201
      %p203 = scmp.ne.s32.totalorder %s194, %s195
      %p204 = scmp.eq.s32.totalorder %s46, 0
      %p205 = por %p203, %p204
      %p206 = scmp.ne.s32.totalorder %s194, %s195
      %p207 = scmp.eq.s32.totalorder %s47, 3
      %p208 = por %p206, %p207
      %p210 = scmp.ne.s32.totalorder %s195, %s209
      %p211 = scmp.eq.s32.totalorder %s47, 0
      %p212 = por %p210, %p211
      %s214 = sadd.s32 %s213, 1
      %p217 = scmp.eq.s32.totalorder %s41, 3
      %p218 = scmp.ne.s32.totalorder %s213, %s215
      %p219 = scmp.eq.s32.totalorder %s41, 0
      %p220 = por %p218, %p219
      %p221 = scmp.ne.s32.totalorder %s213, %s215
      %p222 = scmp.eq.s32.totalorder %s46, 3
      %p223 = por %p221, %p222
      %p224 = scmp.ne.s32.totalorder %s215, %s216
      %p225 = scmp.eq.s32.totalorder %s46, 0
      %p226 = por %p224, %p225
      %p227 = scmp.ne.s32.totalorder %s215, %s216
      %p228 = scmp.eq.s32.totalorder %s47, 3
      %p229 = por %p227, %p228
      %p231 = scmp.ne.s32.totalorder %s216, %s230
      %p232 = scmp.eq.s32.totalorder %s47, 0
      %p233 = por %p231, %p232
      %s235 = sadd.s32 %s234, 1
      %p238 = scmp.eq.s32.totalorder %s41, 3
      %p239 = scmp.ne.s32.totalorder %s234, %s236
      %p240 = scmp.eq.s32.totalorder %s41, 0
      %p241 = por %p239, %p240
      %p242 = scmp.ne.s32.totalorder %s234, %s236
      %p243 = scmp.eq.s32.totalorder %s46, 3
      %p244 = por %p242, %p243
      %p245 = scmp.ne.s32.totalorder %s236, %s237
      %p246 = scmp.eq.s32.totalorder %s46, 0
      %p247 = por %p245, %p246
      %p248 = scmp.ne.s32.totalorder %s236, %s237
      %p249 = scmp.eq.s32.totalorder %s47, 3
      %p250 = por %p248, %p249
      %p252 = scmp.ne.s32.totalorder %s237, %s251
      %p253 = scmp.eq.s32.totalorder %s47, 0
      %p254 = por %p252, %p253
      %s256 = sadd.s32 %s255, 1
      %p259 = scmp.eq.s32.totalorder %s41, 3
      %p260 = scmp.ne.s32.totalorder %s255, %s257
      %p261 = scmp.eq.s32.totalorder %s41, 0
      %p262 = por %p260, %p261
      %p263 = scmp.ne.s32.totalorder %s255, %s257
      %p264 = scmp.eq.s32.totalorder %s46, 3
      %p265 = por %p263, %p264
      %p266 = scmp.ne.s32.totalorder %s257, %s258
      %p267 = scmp.eq.s32.totalorder %s46, 0
      %p268 = por %p266, %p267
      %p269 = scmp.ne.s32.totalorder %s257, %s258
      %p270 = scmp.eq.s32.totalorder %s47, 3
      %p271 = por %p269, %p270
      %p273 = scmp.ne.s32.totalorder %s258, %s272
      %p274 = scmp.eq.s32.totalorder %s47, 0
      %p275 = por %p273, %p274
      %s277 = sadd.s32 %s276, 1
      %p280 = scmp.eq.s32.totalorder %s41, 3
      %p281 = scmp.ne.s32.totalorder %s276, %s278
      %p282 = scmp.eq.s32.totalorder %s41, 0
      %p283 = por %p281, %p282
      %p284 = scmp.ne.s32.totalorder %s276, %s278
      %p285 = scmp.eq.s32.totalorder %s46, 3
      %p286 = por %p284, %p285
      %p287 = scmp.ne.s32.totalorder %s278, %s279
      %p288 = scmp.eq.s32.totalorder %s46, 0
      %p289 = por %p287, %p288
      %p290 = scmp.ne.s32.totalorder %s278, %s279
      %p291 = scmp.eq.s32.totalorder %s47, 3
      %p292 = por %p290, %p291
      %p294 = scmp.ne.s32.totalorder %s279, %s293
      %p295 = scmp.eq.s32.totalorder %s47, 0
      %p296 = por %p294, %p295
      %s298 = sadd.s32 %s297, 1
      %p301 = scmp.eq.s32.totalorder %s41, 3
      %p302 = scmp.ne.s32.totalorder %s297, %s299
      %p303 = scmp.eq.s32.totalorder %s41, 0
      %p304 = por %p302, %p303
      %p305 = scmp.ne.s32.totalorder %s297, %s299
      %p306 = scmp.eq.s32.totalorder %s46, 3
      %p307 = por %p305, %p306
      %p308 = scmp.ne.s32.totalorder %s299, %s300
      %p309 = scmp.eq.s32.totalorder %s46, 0
      %p310 = por %p308, %p309
      %p311 = scmp.ne.s32.totalorder %s299, %s300
      %p312 = scmp.eq.s32.totalorder %s47, 3
      %p313 = por %p311, %p312
      %p315 = scmp.ne.s32.totalorder %s300, %s314
      %p316 = scmp.eq.s32.totalorder %s47, 0
      %p317 = por %p315, %p316
      %s319 = sadd.s32 %s318, 1
      %p322 = scmp.eq.s32.totalorder %s41, 3
      %p323 = scmp.ne.s32.totalorder %s318, %s320
      %p324 = scmp.eq.s32.totalorder %s41, 0
      %p325 = por %p323, %p324
      %p326 = scmp.ne.s32.totalorder %s318, %s320
      %p327 = scmp.eq.s32.totalorder %s46, 3
      %p328 = por %p326, %p327
      %p329 = scmp.ne.s32.totalorder %s320, %s321
      %p330 = scmp.eq.s32.totalorder %s46, 0
      %p331 = por %p329, %p330
      %p332 = scmp.ne.s32.totalorder %s320, %s321
      %p333 = scmp.eq.s32.totalorder %s47, 3
      %p334 = por %p332, %p333
      %p336 = scmp.ne.s32.totalorder %s321, %s335
      %p337 = scmp.eq.s32.totalorder %s47, 0
      %p338 = por %p336, %p337
      %s340 = sadd.s32 %s339, 1
      %p343 = scmp.eq.s32.totalorder %s41, 3
      %p344 = scmp.ne.s32.totalorder %s339, %s341
      %p345 = scmp.eq.s32.totalorder %s41, 0
      %p346 = por %p344, %p345
      %p347 = scmp.ne.s32.totalorder %s339, %s341
      %p348 = scmp.eq.s32.totalorder %s46, 3
      %p349 = por %p347, %p348
      %p350 = scmp.ne.s32.totalorder %s341, %s342
      %p351 = scmp.eq.s32.totalorder %s46, 0
      %p352 = por %p350, %p351
      %p353 = scmp.ne.s32.totalorder %s341, %s342
      %p354 = scmp.eq.s32.totalorder %s47, 3
      %p355 = por %p353, %p354
      %p357 = scmp.ne.s32.totalorder %s342, %s356
      %p358 = scmp.eq.s32.totalorder %s47, 0
      %p359 = por %p357, %p358
      %s361 = sadd.s32 %s360, 1
      %p364 = scmp.eq.s32.totalorder %s41, 3
      %p365 = scmp.ne.s32.totalorder %s360, %s362
      %p366 = scmp.eq.s32.totalorder %s41, 0
      %p367 = por %p365, %p366
      %p368 = scmp.ne.s32.totalorder %s360, %s362
      %p369 = scmp.eq.s32.totalorder %s46, 3
      %p370 = por %p368, %p369
      %p371 = scmp.ne.s32.totalorder %s362, %s363
      %p372 = scmp.eq.s32.totalorder %s46, 0
      %p373 = por %p371, %p372
      %p374 = scmp.ne.s32.totalorder %s362, %s363
      %p375 = scmp.eq.s32.totalorder %s47, 3
      %p376 = por %p374, %p375
      %p378 = scmp.ne.s32.totalorder %s363, %s377
      %p379 = scmp.eq.s32.totalorder %s47, 0
      %p380 = por %p378, %p379
      %s382 = sadd.s32 %s381, 1
      %p385 = scmp.eq.s32.totalorder %s41, 3
      %p386 = scmp.ne.s32.totalorder %s381, %s383
      %p387 = scmp.eq.s32.totalorder %s41, 0
      %p388 = por %p386, %p387
      %p389 = scmp.ne.s32.totalorder %s381, %s383
      %p390 = scmp.eq.s32.totalorder %s46, 3
      %p391 = por %p389, %p390
      %p392 = scmp.ne.s32.totalorder %s383, %s384
      %p393 = scmp.eq.s32.totalorder %s46, 0
      %p394 = por %p392, %p393
      %p395 = scmp.ne.s32.totalorder %s383, %s384
      %p396 = scmp.eq.s32.totalorder %s47, 3
      %p397 = por %p395, %p396
      %p399 = scmp.ne.s32.totalorder %s384, %s398
      %p400 = scmp.eq.s32.totalorder %s47, 0
      %p401 = por %p399, %p400
      %s403 = sadd.s32 %s402, 1
      %p406 = scmp.eq.s32.totalorder %s41, 3
      %p407 = scmp.ne.s32.totalorder %s402, %s404
      %p408 = scmp.eq.s32.totalorder %s41, 0
      %p409 = por %p407, %p408
      %p410 = scmp.ne.s32.totalorder %s402, %s404
      %p411 = scmp.eq.s32.totalorder %s46, 3
      %p412 = por %p410, %p411
      %p413 = scmp.ne.s32.totalorder %s404, %s405
      %p414 = scmp.eq.s32.totalorder %s46, 0
      %p415 = por %p413, %p414
      %p416 = scmp.ne.s32.totalorder %s404, %s405
      %p417 = scmp.eq.s32.totalorder %s47, 3
      %p418 = por %p416, %p417
      %p420 = scmp.ne.s32.totalorder %s405, %s419
      %p421 = scmp.eq.s32.totalorder %s47, 0
      %p422 = por %p420, %p421
      %s424 = sadd.s32 %s423, 1
      %p427 = scmp.eq.s32.totalorder %s41, 3
      %p428 = scmp.ne.s32.totalorder %s423, %s425
      %p429 = scmp.eq.s32.totalorder %s41, 0
      %p430 = por %p428, %p429
      %p431 = scmp.ne.s32.totalorder %s423, %s425
      %p432 = scmp.eq.s32.totalorder %s46, 3
      %p433 = por %p431, %p432
      %p434 = scmp.ne.s32.totalorder %s425, %s426
      %p435 = scmp.eq.s32.totalorder %s46, 0
      %p436 = por %p434, %p435
      %p437 = scmp.ne.s32.totalorder %s425, %s426
      %p438 = scmp.eq.s32.totalorder %s47, 3
      %p439 = por %p437, %p438
      %p441 = scmp.ne.s32.totalorder %s426, %s440
      %p442 = scmp.eq.s32.totalorder %s47, 0
      %p443 = por %p441, %p442
      %s445 = sadd.s32 %s444, 1
      %p448 = scmp.eq.s32.totalorder %s41, 3
      %p449 = scmp.ne.s32.totalorder %s444, %s446
      %p450 = scmp.eq.s32.totalorder %s41, 0
      %p451 = por %p449, %p450
      %p452 = scmp.ne.s32.totalorder %s444, %s446
      %p453 = scmp.eq.s32.totalorder %s46, 3
      %p454 = por %p452, %p453
      %p455 = scmp.ne.s32.totalorder %s446, %s447
      %p456 = scmp.eq.s32.totalorder %s46, 0
      %p457 = por %p455, %p456
      %p458 = scmp.ne.s32.totalorder %s446, %s447
      %p459 = scmp.eq.s32.totalorder %s47, 3
      %p460 = por %p458, %p459
      %p462 = scmp.ne.s32.totalorder %s447, %s461
      %p463 = scmp.eq.s32.totalorder %s47, 0
      %p464 = por %p462, %p463
      %s465 = ssub.s32 %s48, %s60
      %p466 = scmp.eq.s32.totalorder %s465, 0
      %s468 = sadd.s32 %s467, 1
      %s469 = scalar_select %p466, %s467, %s468
      %p472 = pneg %p466
      %p473 = scmp.eq.s32.totalorder %s41, 3
      %p474 = por %p472, %p473
      %p475 = scmp.ne.s32.totalorder %s467, %s470
      %p476 = scmp.eq.s32.totalorder %s41, 0
      %p477 = por %p475, %p476
      %p478 = scmp.ne.s32.totalorder %s467, %s470
      %p479 = scmp.eq.s32.totalorder %s46, 3
      %p480 = por %p478, %p479
      %p481 = scmp.ne.s32.totalorder %s470, %s471
      %p482 = scmp.eq.s32.totalorder %s46, 0
      %p483 = por %p481, %p482
      %p484 = scmp.ne.s32.totalorder %s470, %s471
      %p485 = scmp.eq.s32.totalorder %s47, 3
      %p486 = por %p484, %p485
      %p488 = scmp.ne.s32.totalorder %s471, %s487
      %p489 = scmp.eq.s32.totalorder %s47, 0
      %p490 = por %p488, %p489
      %s491 = ssub.s32 %s48, %s60
      %p492 = scmp.eq.s32.totalorder %s491, 0
      %s494 = sadd.s32 %s493, 1
      %s495 = scalar_select %p492, %s493, %s494
      %p498 = pneg %p492
      %p499 = scmp.eq.s32.totalorder %s41, 3
      %p500 = por %p498, %p499
      %p501 = scmp.ne.s32.totalorder %s493, %s496
      %p502 = scmp.eq.s32.totalorder %s41, 0
      %p503 = por %p501, %p502
      %p504 = scmp.ne.s32.totalorder %s493, %s496
      %p505 = scmp.eq.s32.totalorder %s46, 3
      %p506 = por %p504, %p505
      %p507 = scmp.ne.s32.totalorder %s496, %s497
      %p508 = scmp.eq.s32.totalorder %s46, 0
      %p509 = por %p507, %p508
      %p510 = scmp.ne.s32.totalorder %s496, %s497
      %p511 = scmp.eq.s32.totalorder %s47, 3
      %p512 = por %p510, %p511
      %p514 = scmp.ne.s32.totalorder %s497, %s513
      %p515 = scmp.eq.s32.totalorder %s47, 0
      %p516 = por %p514, %p515
      %s517 = ssub.s32 %s48, %s60
      %p518 = scmp.eq.s32.totalorder %s517, 0
      %s520 = sadd.s32 %s519, 1
      %s521 = scalar_select %p518, %s519, %s520
      %p524 = pneg %p518
      %p525 = scmp.eq.s32.totalorder %s41, 3
      %p526 = por %p524, %p525
      %p527 = scmp.ne.s32.totalorder %s519, %s522
      %p528 = scmp.eq.s32.totalorder %s41, 0
      %p529 = por %p527, %p528
      %p530 = scmp.ne.s32.totalorder %s519, %s522
      %p531 = scmp.eq.s32.totalorder %s46, 3
      %p532 = por %p530, %p531
      %p533 = scmp.ne.s32.totalorder %s522, %s523
      %p534 = scmp.eq.s32.totalorder %s46, 0
      %p535 = por %p533, %p534
      %p536 = scmp.ne.s32.totalorder %s522, %s523
      %p537 = scmp.eq.s32.totalorder %s47, 3
      %p538 = por %p536, %p537
      %p540 = scmp.ne.s32.totalorder %s523, %s539
      %p541 = scmp.eq.s32.totalorder %s47, 0
      %p542 = por %p540, %p541
      %p543 = scmp.le.s32.totalorder 1, %s41
      %p544 = scmp.lt.s32.totalorder %s41, 5
      %p545 = pnand %p543, %p544
      %p546 = pneg %p545
      // Predicated region
      $region9: #{onnx_text_encoder.1} parent=5 // pred_check
        _
      $region10: #{onnx_text_encoder.1} parent=5 // pred_check_branch
        %548 = sbr.rel (%p545) target = $region12
      $region11: #{onnx_text_encoder.1} parent=5 // pred_region
        %s549 = ssub.s32 %s41, 1
        // Predicated region
        $region13: #{onnx_text_encoder.1} parent=11 // pred_check
          %p550 = pneg %p100
        $region14: #{onnx_text_encoder.1} parent=11 // pred_check_branch
          %552 = sbr.rel (%p550) target = $region16
        $region15: #{onnx_text_encoder.1} parent=11 // pred_region
          _
        $region16: #{onnx_text_encoder.1} parent=11 // pred_fallthru
          _
        // Predicated region
        $region17: #{onnx_text_encoder.1} parent=11 // pred_check
          %p553 = pneg %p121
        $region18: #{onnx_text_encoder.1} parent=11 // pred_check_branch
          %555 = sbr.rel (%p553) target = $region20
        $region19: #{onnx_text_encoder.1} parent=11 // pred_region
          _
        $region20: #{onnx_text_encoder.1} parent=11 // pred_fallthru
          _
        // Predicated region
        $region21: #{onnx_text_encoder.1} parent=11 // pred_check
          %p556 = pneg %p142
        $region22: #{onnx_text_encoder.1} parent=11 // pred_check_branch
          %558 = sbr.rel (%p556) target = $region24
        $region23: #{onnx_text_encoder.1} parent=11 // pred_region
          _
        $region24: #{onnx_text_encoder.1} parent=11 // pred_fallthru
          _
        // Predicated region
        $region25: #{onnx_text_encoder.1} parent=11 // pred_check
          %p559 = pneg %p163
        $region26: #{onnx_text_encoder.1} parent=11 // pred_check_branch
          %561 = sbr.rel (%p559) target = $region28
        $region27: #{onnx_text_encoder.1} parent=11 // pred_region
          _
        $region28: #{onnx_text_encoder.1} parent=11 // pred_fallthru
          _
        // Predicated region
        $region29: #{onnx_text_encoder.1} parent=11 // pred_check
          %p562 = pneg %p184
        $region30: #{onnx_text_encoder.1} parent=11 // pred_check_branch
          %564 = sbr.rel (%p562) target = $region32
        $region31: #{onnx_text_encoder.1} parent=11 // pred_region
          _
        $region32: #{onnx_text_encoder.1} parent=11 // pred_fallthru
          _
        // Predicated region
        $region33: #{onnx_text_encoder.1} parent=11 // pred_check
          %p565 = pneg %p205
        $region34: #{onnx_text_encoder.1} parent=11 // pred_check_branch
          %567 = sbr.rel (%p565) target = $region36
        $region35: #{onnx_text_encoder.1} parent=11 // pred_region
          _
        $region36: #{onnx_text_encoder.1} parent=11 // pred_fallthru
          _
        // Predicated region
        $region37: #{onnx_text_encoder.1} parent=11 // pred_check
          %p568 = pneg %p226
        $region38: #{onnx_text_encoder.1} parent=11 // pred_check_branch
          %570 = sbr.rel (%p568) target = $region40
        $region39: #{onnx_text_encoder.1} parent=11 // pred_region
          _
        $region40: #{onnx_text_encoder.1} parent=11 // pred_fallthru
          _
        // Predicated region
        $region41: #{onnx_text_encoder.1} parent=11 // pred_check
          %p571 = pneg %p247
        $region42: #{onnx_text_encoder.1} parent=11 // pred_check_branch
          %573 = sbr.rel (%p571) target = $region44
        $region43: #{onnx_text_encoder.1} parent=11 // pred_region
          _
        $region44: #{onnx_text_encoder.1} parent=11 // pred_fallthru
          _
        // Predicated region
        $region45: #{onnx_text_encoder.1} parent=11 // pred_check
          %p574 = pneg %p268
        $region46: #{onnx_text_encoder.1} parent=11 // pred_check_branch
          %576 = sbr.rel (%p574) target = $region48
        $region47: #{onnx_text_encoder.1} parent=11 // pred_region
          _
        $region48: #{onnx_text_encoder.1} parent=11 // pred_fallthru
          _
        // Predicated region
        $region49: #{onnx_text_encoder.1} parent=11 // pred_check
          %p577 = pneg %p289
        $region50: #{onnx_text_encoder.1} parent=11 // pred_check_branch
          %579 = sbr.rel (%p577) target = $region52
        $region51: #{onnx_text_encoder.1} parent=11 // pred_region
          _
        $region52: #{onnx_text_encoder.1} parent=11 // pred_fallthru
          _
        // Predicated region
        $region53: #{onnx_text_encoder.1} parent=11 // pred_check
          %p580 = pneg %p310
        $region54: #{onnx_text_encoder.1} parent=11 // pred_check_branch
          %582 = sbr.rel (%p580) target = $region56
        $region55: #{onnx_text_encoder.1} parent=11 // pred_region
          _
        $region56: #{onnx_text_encoder.1} parent=11 // pred_fallthru
          _
        // Predicated region
        $region57: #{onnx_text_encoder.1} parent=11 // pred_check
          %p583 = pneg %p331
        $region58: #{onnx_text_encoder.1} parent=11 // pred_check_branch
          %585 = sbr.rel (%p583) target = $region60
        $region59: #{onnx_text_encoder.1} parent=11 // pred_region
          _
        $region60: #{onnx_text_encoder.1} parent=11 // pred_fallthru
          _
        // Predicated region
        $region61: #{onnx_text_encoder.1} parent=11 // pred_check
          %p586 = pneg %p352
        $region62: #{onnx_text_encoder.1} parent=11 // pred_check_branch
          %588 = sbr.rel (%p586) target = $region64
        $region63: #{onnx_text_encoder.1} parent=11 // pred_region
          _
        $region64: #{onnx_text_encoder.1} parent=11 // pred_fallthru
          _
        // Predicated region
        $region65: #{onnx_text_encoder.1} parent=11 // pred_check
          %p589 = pneg %p373
        $region66: #{onnx_text_encoder.1} parent=11 // pred_check_branch
          %591 = sbr.rel (%p589) target = $region68
        $region67: #{onnx_text_encoder.1} parent=11 // pred_region
          _
        $region68: #{onnx_text_encoder.1} parent=11 // pred_fallthru
          _
        // Predicated region
        $region69: #{onnx_text_encoder.1} parent=11 // pred_check
          %p592 = pneg %p394
        $region70: #{onnx_text_encoder.1} parent=11 // pred_check_branch
          %594 = sbr.rel (%p592) target = $region72
        $region71: #{onnx_text_encoder.1} parent=11 // pred_region
          _
        $region72: #{onnx_text_encoder.1} parent=11 // pred_fallthru
          _
        // Predicated region
        $region73: #{onnx_text_encoder.1} parent=11 // pred_check
          %p595 = pneg %p415
        $region74: #{onnx_text_encoder.1} parent=11 // pred_check_branch
          %597 = sbr.rel (%p595) target = $region76
        $region75: #{onnx_text_encoder.1} parent=11 // pred_region
          _
        $region76: #{onnx_text_encoder.1} parent=11 // pred_fallthru
          _
        // Predicated region
        $region77: #{onnx_text_encoder.1} parent=11 // pred_check
          %p598 = pneg %p436
        $region78: #{onnx_text_encoder.1} parent=11 // pred_check_branch
          %600 = sbr.rel (%p598) target = $region80
        $region79: #{onnx_text_encoder.1} parent=11 // pred_region
          _
        $region80: #{onnx_text_encoder.1} parent=11 // pred_fallthru
          _
        // Predicated region
        $region81: #{onnx_text_encoder.1} parent=11 // pred_check
          %p601 = pneg %p457
        $region82: #{onnx_text_encoder.1} parent=11 // pred_check_branch
          %603 = sbr.rel (%p601) target = $region84
        $region83: #{onnx_text_encoder.1} parent=11 // pred_region
          _
        $region84: #{onnx_text_encoder.1} parent=11 // pred_fallthru
          _
      $region12: #{onnx_text_encoder.1} parent=5 // pred_fallthru
        _
      %p604 = scmp.lt.s32.totalorder %s41, 4
      // Predicated region
      $region85: #{onnx_text_encoder.1} parent=5 // pred_check
        %p605 = pneg %p604
      $region86: #{onnx_text_encoder.1} parent=5 // pred_check_branch
        %607 = sbr.rel (%p605) target = $region88
      $region87: #{onnx_text_encoder.1} parent=5 // pred_region
        // Predicated region
        $region89: #{onnx_text_encoder.1} parent=87 // pred_check
          %p608 = pneg %p73
        $region90: #{onnx_text_encoder.1} parent=87 // pred_check_branch
          %610 = sbr.rel (%p608) target = $region92
        $region91: #{onnx_text_encoder.1} parent=87 // pred_region
          %p611 = scmp.lt.s32.totalorder %s48, 1
          %s612 = scalar_select %p611, %s48, 1
          %s613 = smul.addr %s612, 8
          %s614 = scalar_lea.vmem %s1, %s613
        $region92: #{onnx_text_encoder.1} parent=87 // pred_fallthru
          _
      $region88: #{onnx_text_encoder.1} parent=5 // pred_fallthru
        _
      %p615 = scmp.le.s32.totalorder 1, %s41
      %p616 = scmp.lt.s32.totalorder %s41, 5
      %p617 = pnand %p615, %p616
      %p618 = pneg %p617
      // Predicated region
      $region93: #{onnx_text_encoder.1} parent=5 // pred_check
        _
      $region94: #{onnx_text_encoder.1} parent=5 // pred_check_branch
        %620 = sbr.rel (%p617) target = $region96
      $region95: #{onnx_text_encoder.1} parent=5 // pred_region
        %s621 = ssub.s32 %s41, 1
        %p622 = scmp.lt.s32.totalorder %s50, 1
        %s623 = scalar_select %p622, %s50, 1
        %s624 = smul.addr %s623, 8
        %s625 = scalar_lea.vmem %s1, %s624
        %p626 = pneg %p79
        %p627 = pneg %p76
        %p628 = pneg %p100
        %p629 = pneg %p97
        %p630 = pneg %p121
        %p631 = pneg %p118
        %p632 = pneg %p142
        %p633 = pneg %p139
        %p634 = pneg %p163
        %p635 = pneg %p160
        %p636 = pneg %p184
        %p637 = pneg %p181
        %p638 = pneg %p205
        %p639 = pneg %p202
        %p640 = pneg %p226
        %p641 = pneg %p223
        %p642 = pneg %p247
        %p643 = pneg %p244
        %p644 = pneg %p268
        %p645 = pneg %p265
        %p646 = pneg %p289
        %p647 = pneg %p286
        %p648 = pneg %p310
        %p649 = pneg %p307
        %p650 = pneg %p331
        %p651 = pneg %p328
        %p652 = pneg %p352
        %p653 = pneg %p349
        %p654 = pneg %p373
        %p655 = pneg %p370
        %p656 = pneg %p394
        %p657 = pneg %p391
        %p658 = pneg %p415
        %p659 = pneg %p412
        %p660 = pneg %p436
        %p661 = pneg %p433
        %p662 = pneg %p457
        %p663 = pneg %p454
        %p664 = pneg %p483
        %p665 = pneg %p480
        %s666 = sand.u32 %s470, 1
        %s667 = scalar_lea.sflag [#allocation7], %s666
        %s668 = sand.u32 %s470, 1
        %s669 = smul.addr %s668, 8
        %s670 = scalar_lea.vmem [#allocation6], %s669
        %p671 = pneg %p509
        %p672 = pneg %p506
        %s673 = sand.u32 %s46, 1
        %s674 = scalar_lea.sflag [#allocation9], %s673
        %s675 = sand.u32 %s496, 1
        %s676 = smul.addr %s675, 8
        %s677 = scalar_lea.vmem [#allocation8], %s676
        %p678 = pneg %p535
        %p679 = pneg %p532
        %s680 = sand.u32 %s46, 1
        %s681 = scalar_lea.sflag [#allocation9], %s680
        %s682 = sand.u32 %s522, 1
        %s683 = smul.addr %s682, 8
        %s684 = scalar_lea.vmem [#allocation10], %s683
        %p685 = scmp.lt.s32.totalorder %s50, 1
        %s686 = scalar_select %p685, %s50, 1
        %s687 = smul.addr %s686, 8
        %s688 = scalar_lea.vmem %s1, %s687
        %s690 = sld [smem:[#allocation5 + %s50]]
        %p691 = scmp.eq.s32.totalorder %s51, 0
        // Predicated region
        $region97: #{onnx_text_encoder.1} parent=95 // pred_check
          %p692 = pneg %p691
        $region98: #{onnx_text_encoder.1} parent=95 // pred_check_branch
          %694 = sbr.rel (%p692) target = $region100
        $region99: #{onnx_text_encoder.1} parent=95 // pred_region
          %v695 = vld [vmem:[%s688] sm:$0xff]
          %vm696 = vcmask 261120
          %697 = vst.msk [vmem:[#allocation2] sm:$0xff] %vm696, %v695
        $region100: #{onnx_text_encoder.1} parent=95 // pred_fallthru
          _
        %v698 = vld [vmem:[#allocation2] sm:$0xff]
        %v699 = vlaneseq
        %v700 = vand.u32 %v699, 127
        %v701 = vstv %s690
        %vm702 = vcmp.lt.s32.totalorder %v700, %v701
        %v703 = vsel %vm702, 0.0, -1e+30
        %s704 = scalar_lea.vmem %s2, %s51
        %v705 = vld [vmem:[%s704] sm:$0x1]
        %s706 = scalar_lea.vmem %s3, %s51
        %v707 = vld [vmem:[%s706] sm:$0x1]
        %vm708 = vcmask 261120
        %v709 = vsel %vm708, %v698, 0.0
        %710 = vadd.xlane.f32.xlu0 %v709
        %v711 = vpop.xlane.xlu0 %710
        %v712 = vrcp.pop 32.0
        %v713 = vmul.f32 %v711, %v712
        %v714 = vsub.f32 %v698, %v713
        %v715 = vmul.f32 %v714, %v714
        %v716 = vsel %vm708, %v715, 0.0
        %717 = vadd.xlane.f32.xlu0 %v716
        %v718 = vpop.xlane.xlu0 %717
        %v719 = vmul.f32 %v718, %v712
        %v720 = vadd.f32 %v719, 1e-12
        %v721 = vrsqrt.pop %v720
        %v722 = vmul.f32 %v714, %v721
        %v724 = vlaneseq
        %v725 = vshrl.u32 %v724, 7
        %v726 = vsub.s32 0, %v725
        %v727 = vrot.slane %v705, %v726
        %v729 = vmul.f32 %v722, %v727
        %v731 = vlaneseq
        %v732 = vshrl.u32 %v731, 7
        %v733 = vsub.s32 0, %v732
        %v734 = vrot.slane %v707, %v733
        %v736 = vadd.f32 %v729, %v734
        %s737 = smul.u32 %s51, 4
        %s738 = smul.addr %s737, 4
        %s739 = scalar_lea.vmem %s4, %s738
        %v740 = vld [vmem:[%s739] sm:$0xf]
        %v741 = vld [vmem:[%s739 + $0x4] sm:$0xf]
        %v742 = vld [vmem:[%s739 + $0x8] sm:$0xf]
        %v743 = vld [vmem:[%s739 + $0xc] sm:$0xf]
        %v744 = vpack.c.bf16 %v736, %v736
        %s745 = scalar_lea.vmem %s5, %s51
        %v746 = vld [vmem:[%s745] sm:$0x1]
        %v748 = vlaneseq
        %v749 = vshrl.u32 %v748, 7
        %v750 = vsub.s32 0, %v749
        %v751 = vrot.slane %v746, %v750
        %v757 = vunpack.c.l.b16 %v740
        %v758 = vunpack.c.l.b16 %v741
        %v759 = vunpack.c.l.b16 %v742
        %v760 = vunpack.c.l.b16 %v743
        %v761 = vpack.c.b16 %v758, %v757
        %v762 = vpack.c.b16 %v760, %v759
        %v766 = vsel %vm708, %v744, 0
        %768 = vmatprep.subr.bf16.mxu0 0
        %769 = vmatpush1.bf16.msra.mxu0 %v761
        %770 = vmatprep.subr.bf16.mxu0 0
        %771 = vmatpush1.bf16.msra.mxu0 %v762
        %772 = vmatprep.subr.bf16.mxu0 0
        %773 = vmatpush1.bf16.msra.mxu0 0
        %774 = vmatprep.subr.bf16.mxu0 0
        %775 = vmatpush1.bf16.msra.mxu0 0
        %776 = vmatprep.subr.bf16.mxu0 0
        %777 = vmatpush1.bf16.msra.mxu0 0
        %778 = vmatprep.subr.bf16.mxu0 0
        %779 = vmatpush1.bf16.msra.mxu0 0
        %780 = vmatprep.subr.bf16.mxu0 0
        %781 = vmatpush1.bf16.msra.mxu0 0
        %782 = vmatprep.subr.bf16.mxu0 0
        %783 = vmatpush1.bf16.msra.mxu0 0
        %784 = vmatprep.subr.bf16.mxu0 0
        %785 = vmatpush1.bf16.msra.mxu0 0
        %786 = vmatprep.subr.bf16.mxu0 0
        %787 = vmatpush1.bf16.msra.mxu0 0
        %788 = vmatprep.subr.bf16.mxu0 0
        %789 = vmatpush1.bf16.msra.mxu0 0
        %790 = vmatprep.subr.bf16.mxu0 0
        %791 = vmatpush1.bf16.msra.mxu0 0
        %792 = vmatprep.subr.bf16.mxu0 0
        %793 = vmatpush1.bf16.msra.mxu0 0
        %794 = vmatprep.subr.bf16.mxu0 0
        %795 = vmatpush1.bf16.msra.mxu0 0
        %796 = vmatprep.subr.bf16.mxu0 0
        %797 = vmatpush1.bf16.msra.mxu0 0
        %798 = vmatprep.subr.bf16.mxu0 0
        %799 = vmatpush1.bf16.msra.mxu0 0
        %800 = vmatprep.mubr.bf16.mxu0 0
        %801 = vmatmul.mubr.bf16.gmra.mrb[0].mxu0 %v766
        %v802 = vpop.f32.mrb[0].mxu0
        %v803 = vadd.f32 %v751, %v802
        %v804 = vpop.f32.mrb[0].mxu0
        %v805 = vpop.f32.mrb[0].mxu0
        %v806 = vpop.f32.mrb[0].mxu0
        %807 = vdwg.mxu0
        %v808 = vpack.c.bf16 %v803, %v803
        %810 = vrot.lane.b32.xlu0 %v808, 96
        %v811 = vpop.permute.xlu0 %810
        %vm812 = vcmask 130048
        %v814 = vsel %vm812, %v808, 0
        %v817 = vsel %vm812, %v811, 0
        %819 = vmatprep.subr.bf16.mxu0 0
        %820 = vmatpush1.bf16.xpose.msra.mxu0 %v817
        %821 = vmatprep.subr.bf16.mxu0 0
        %822 = vmatpush1.bf16.xpose.msra.mxu0 0
        %823 = vmatprep.subr.bf16.mxu0 0
        %824 = vmatpush1.bf16.xpose.msra.mxu0 0
        %825 = vmatprep.subr.bf16.mxu0 0
        %826 = vmatpush1.bf16.xpose.msra.mxu0 0
        %827 = vmatprep.subr.bf16.mxu0 0
        %828 = vmatpush1.bf16.xpose.msra.mxu0 0
        %829 = vmatprep.subr.bf16.mxu0 0
        %830 = vmatpush1.bf16.xpose.msra.mxu0 0
        %831 = vmatprep.subr.bf16.mxu0 0
        %832 = vmatpush1.bf16.xpose.msra.mxu0 0
        %833 = vmatprep.subr.bf16.mxu0 0
        %834 = vmatpush1.bf16.xpose.msra.mxu0 0
        %835 = vmatprep.subr.bf16.mxu0 0
        %836 = vmatpush1.bf16.xpose.msra.mxu0 0
        %837 = vmatprep.subr.bf16.mxu0 0
        %838 = vmatpush1.bf16.xpose.msra.mxu0 0
        %839 = vmatprep.subr.bf16.mxu0 0
        %840 = vmatpush1.bf16.xpose.msra.mxu0 0
        %841 = vmatprep.subr.bf16.mxu0 0
        %842 = vmatpush1.bf16.xpose.msra.mxu0 0
        %843 = vmatprep.subr.bf16.mxu0 0
        %844 = vmatpush1.bf16.xpose.msra.mxu0 0
        %845 = vmatprep.subr.bf16.mxu0 0
        %846 = vmatpush1.bf16.xpose.msra.mxu0 0
        %847 = vmatprep.subr.bf16.mxu0 0
        %848 = vmatpush1.bf16.xpose.msra.mxu0 0
        %849 = vmatprep.subr.bf16.mxu0 0
        %850 = vmatpush1.bf16.xpose.msra.mxu0 0
        %851 = vmatprep.mubr.bf16.mxu0 0
        %852 = vmatmul.mubr.bf16.gmra.mrb[0].mxu0 %v814
        %v853 = vpop.f32.mrb[0].mxu0
        %v854 = vadd.f32 %v703, %v853
        %v855 = vpop.f32.mrb[0].mxu0
        %v856 = vpop.f32.mrb[0].mxu0
        %v857 = vpop.f32.mrb[0].mxu0
        %858 = vdwg.mxu0
        %vm859 = vcmask 64512
        %v860 = vsel %vm859, %v854, -inf
        %861 = vmax.xlane.f32.xlu0 %v860
        %v862 = vpop.xlane.xlu0 %861
        %v863 = vsub.f32 %v854, %v862
        %v864 = vmul.f32 %v863, 1.442695
        %v865 = vpow.pop %v864
        %v866 = vsel %vm859, %v865, 0.0
        %867 = vadd.xlane.f32.xlu0 %v866
        %v868 = vpop.xlane.xlu0 %867
        %v869 = vrcp.pop %v868
        %v870 = vmul.f32 %v865, %v869
        %v871 = vpack.c.bf16 %v870, %v870
        %872 = vrot.lane.b32.xlu0 %v808, 64
        %v873 = vpop.permute.xlu0 %872
        %v875 = vsel %vm859, %v871, 0
        %vm877 = vcmask 1043456
        %v879 = vsel %vm877, %v873, 0
        %881 = vmatprep.subr.bf16.mxu0 0
        %882 = vmatpush1.bf16.msra.mxu0 %v879
        %883 = vmatprep.subr.bf16.mxu0 0
        %884 = vmatpush1.bf16.msra.mxu0 0
        %885 = vmatprep.subr.bf16.mxu0 0
        %886 = vmatpush1.bf16.msra.mxu0 0
        %887 = vmatprep.subr.bf16.mxu0 0
        %888 = vmatpush1.bf16.msra.mxu0 0
        %889 = vmatprep.subr.bf16.mxu0 0
        %890 = vmatpush1.bf16.msra.mxu0 0
        %891 = vmatprep.subr.bf16.mxu0 0
        %892 = vmatpush1.bf16.msra.mxu0 0
        %893 = vmatprep.subr.bf16.mxu0 0
        %894 = vmatpush1.bf16.msra.mxu0 0
        %895 = vmatprep.subr.bf16.mxu0 0
        %896 = vmatpush1.bf16.msra.mxu0 0
        %897 = vmatprep.subr.bf16.mxu0 0
        %898 = vmatpush1.bf16.msra.mxu0 0
        %899 = vmatprep.subr.bf16.mxu0 0
        %900 = vmatpush1.bf16.msra.mxu0 0
        %901 = vmatprep.subr.bf16.mxu0 0
        %902 = vmatpush1.bf16.msra.mxu0 0
        %903 = vmatprep.subr.bf16.mxu0 0
        %904 = vmatpush1.bf16.msra.mxu0 0
        %905 = vmatprep.subr.bf16.mxu0 0
        %906 = vmatpush1.bf16.msra.mxu0 0
        %907 = vmatprep.subr.bf16.mxu0 0
        %908 = vmatpush1.bf16.msra.mxu0 0
        %909 = vmatprep.subr.bf16.mxu0 0
        %910 = vmatpush1.bf16.msra.mxu0 0
        %911 = vmatprep.subr.bf16.mxu0 0
        %912 = vmatpush1.bf16.msra.mxu0 0
        %913 = vmatprep.mubr.bf16.mxu0 0
        %914 = vmatmul.mubr.bf16.gmra.mrb[0].mxu0 %v875
        %v915 = vpop.f32.mrb[0].mxu0
        %v916 = vadd.f32 0.0, %v915
        %v917 = vpop.f32.mrb[0].mxu0
        %v918 = vpop.f32.mrb[0].mxu0
        %v919 = vpop.f32.mrb[0].mxu0
        %920 = vdwg.mxu0
        %921 = vst.msk [vmem:[#allocation3] sm:$0xff] %vm812, %v916
        %922 = vrot.lane.b32.xlu0 %v808, 112
        %v923 = vpop.permute.xlu0 %922
        %924 = vrot.lane.b32.xlu0 %v808, 80
        %v925 = vpop.permute.xlu0 %924
        %v927 = vsel %vm812, %v923, 0
        %v930 = vsel %vm812, %v925, 0
        %932 = vmatprep.subr.bf16.mxu0 0
        %933 = vmatpush1.bf16.xpose.msra.mxu0 %v930
        %934 = vmatprep.subr.bf16.mxu0 0
        %935 = vmatpush1.bf16.xpose.msra.mxu0 0
        %936 = vmatprep.subr.bf16.mxu0 0
        %937 = vmatpush1.bf16.xpose.msra.mxu0 0
        %938 = vmatprep.subr.bf16.mxu0 0
        %939 = vmatpush1.bf16.xpose.msra.mxu0 0
        %940 = vmatprep.subr.bf16.mxu0 0
        %941 = vmatpush1.bf16.xpose.msra.mxu0 0
        %942 = vmatprep.subr.bf16.mxu0 0
        %943 = vmatpush1.bf16.xpose.msra.mxu0 0
        %944 = vmatprep.subr.bf16.mxu0 0
        %945 = vmatpush1.bf16.xpose.msra.mxu0 0
        %946 = vmatprep.subr.bf16.mxu0 0
        %947 = vmatpush1.bf16.xpose.msra.mxu0 0
        %948 = vmatprep.subr.bf16.mxu0 0
        %949 = vmatpush1.bf16.xpose.msra.mxu0 0
        %950 = vmatprep.subr.bf16.mxu0 0
        %951 = vmatpush1.bf16.xpose.msra.mxu0 0
        %952 = vmatprep.subr.bf16.mxu0 0
        %953 = vmatpush1.bf16.xpose.msra.mxu0 0
        %954 = vmatprep.subr.bf16.mxu0 0
        %955 = vmatpush1.bf16.xpose.msra.mxu0 0
        %956 = vmatprep.subr.bf16.mxu0 0
        %957 = vmatpush1.bf16.xpose.msra.mxu0 0
        %958 = vmatprep.subr.bf16.mxu0 0
        %959 = vmatpush1.bf16.xpose.msra.mxu0 0
        %960 = vmatprep.subr.bf16.mxu0 0
        %961 = vmatpush1.bf16.xpose.msra.mxu0 0
        %962 = vmatprep.subr.bf16.mxu0 0
        %963 = vmatpush1.bf16.xpose.msra.mxu0 0
        %964 = vmatprep.mubr.bf16.mxu0 0
        %965 = vmatmul.mubr.bf16.gmra.mrb[0].mxu0 %v927
        %v966 = vpop.f32.mrb[0].mxu0
        %v967 = vadd.f32 %v703, %v966
        %v968 = vpop.f32.mrb[0].mxu0
        %v969 = vpop.f32.mrb[0].mxu0
        %v970 = vpop.f32.mrb[0].mxu0
        %971 = vdwg.mxu0
        %v972 = vsel %vm859, %v967, -inf
        %973 = vmax.xlane.f32.xlu0 %v972
        %v974 = vpop.xlane.xlu0 %973
        %v975 = vsub.f32 %v967, %v974
        %v976 = vmul.f32 %v975, 1.442695
        %v977 = vpow.pop %v976
        %v978 = vsel %vm859, %v977, 0.0
        %979 = vadd.xlane.f32.xlu0 %v978
        %v980 = vpop.xlane.xlu0 %979
        %v981 = vrcp.pop %v980
        %v982 = vmul.f32 %v977, %v981
        %v983 = vpack.c.bf16 %v982, %v982
        %984 = vrot.lane.b32.xlu0 %v808, 48
        %v985 = vpop.permute.xlu0 %984
        %v987 = vsel %vm859, %v983, 0
        %v990 = vsel %vm877, %v985, 0
        %992 = vmatprep.subr.bf16.mxu0 0
        %993 = vmatpush1.bf16.msra.mxu0 %v990
        %994 = vmatprep.subr.bf16.mxu0 0
        %995 = vmatpush1.bf16.msra.mxu0 0
        %996 = vmatprep.subr.bf16.mxu0 0
        %997 = vmatpush1.bf16.msra.mxu0 0
        %998 = vmatprep.subr.bf16.mxu0 0
        %999 = vmatpush1.bf16.msra.mxu0 0
        %1000 = vmatprep.subr.bf16.mxu0 0
        %1001 = vmatpush1.bf16.msra.mxu0 0
        %1002 = vmatprep.subr.bf16.mxu0 0
        %1003 = vmatpush1.bf16.msra.mxu0 0
        %1004 = vmatprep.subr.bf16.mxu0 0
        %1005 = vmatpush1.bf16.msra.mxu0 0
        %1006 = vmatprep.subr.bf16.mxu0 0
        %1007 = vmatpush1.bf16.msra.mxu0 0
        %1008 = vmatprep.subr.bf16.mxu0 0
        %1009 = vmatpush1.bf16.msra.mxu0 0
        %1010 = vmatprep.subr.bf16.mxu0 0
        %1011 = vmatpush1.bf16.msra.mxu0 0
        %1012 = vmatprep.subr.bf16.mxu0 0
        %1013 = vmatpush1.bf16.msra.mxu0 0
        %1014 = vmatprep.subr.bf16.mxu0 0
        %1015 = vmatpush1.bf16.msra.mxu0 0
        %1016 = vmatprep.subr.bf16.mxu0 0
        %1017 = vmatpush1.bf16.msra.mxu0 0
        %1018 = vmatprep.subr.bf16.mxu0 0
        %1019 = vmatpush1.bf16.msra.mxu0 0
        %1020 = vmatprep.subr.bf16.mxu0 0
        %1021 = vmatpush1.bf16.msra.mxu0 0
        %1022 = vmatprep.subr.bf16.mxu0 0
        %1023 = vmatpush1.bf16.msra.mxu0 0
        %1024 = vmatprep.mubr.bf16.mxu0 0
        %1025 = vmatmul.mubr.bf16.gmra.mrb[0].mxu0 %v987
        %v1026 = vpop.f32.mrb[0].mxu0
        %v1027 = vadd.f32 0.0, %v1026
        %v1028 = vpop.f32.mrb[0].mxu0
        %v1029 = vpop.f32.mrb[0].mxu0
        %v1030 = vpop.f32.mrb[0].mxu0
        %1031 = vdwg.mxu0
        %1033 = vrot.lane.b32.xlu0 %v1027, 16
        %v1034 = vpop.permute.xlu0 %1033
        %vm1036 = vcmask 261248
        %1037 = vst.msk [vmem:[#allocation3] sm:$0xff] %vm1036, %v1034
        %v1038 = vld [vmem:[#allocation3] sm:$0xff]
        %s1039 = smul.addr %s737, 4
        %s1040 = scalar_lea.vmem %s6, %s1039
        %v1041 = vld [vmem:[%s1040] sm:$0xf]
        %v1042 = vld [vmem:[%s1040 + $0x4] sm:$0xf]
        %v1043 = vld [vmem:[%s1040 + $0x8] sm:$0xf]
        %v1044 = vld [vmem:[%s1040 + $0xc] sm:$0xf]
        %v1045 = vpack.c.bf16 %v1038, %v1038
        %v1050 = vunpack.c.l.b16 %v1041
        %v1051 = vunpack.c.l.b16 %v1042
        %v1052 = vunpack.c.l.b16 %v1043
        %v1053 = vunpack.c.l.b16 %v1044
        %v1054 = vpack.c.b16 %v1051, %v1050
        %v1055 = vpack.c.b16 %v1053, %v1052
        %v1059 = vsel %vm708, %v1045, 0
        %1061 = vmatprep.subr.bf16.mxu0 0
        %1062 = vmatpush1.bf16.msra.mxu0 %v1054
        %1063 = vmatprep.subr.bf16.mxu0 0
        %1064 = vmatpush1.bf16.msra.mxu0 %v1055
        %1065 = vmatprep.subr.bf16.mxu0 0
        %1066 = vmatpush1.bf16.msra.mxu0 0
        %1067 = vmatprep.subr.bf16.mxu0 0
        %1068 = vmatpush1.bf16.msra.mxu0 0
        %1069 = vmatprep.subr.bf16.mxu0 0
        %1070 = vmatpush1.bf16.msra.mxu0 0
        %1071 = vmatprep.subr.bf16.mxu0 0
        %1072 = vmatpush1.bf16.msra.mxu0 0
        %1073 = vmatprep.subr.bf16.mxu0 0
        %1074 = vmatpush1.bf16.msra.mxu0 0
        %1075 = vmatprep.subr.bf16.mxu0 0
        %1076 = vmatpush1.bf16.msra.mxu0 0
        %1077 = vmatprep.subr.bf16.mxu0 0
        %1078 = vmatpush1.bf16.msra.mxu0 0
        %1079 = vmatprep.subr.bf16.mxu0 0
        %1080 = vmatpush1.bf16.msra.mxu0 0
        %1081 = vmatprep.subr.bf16.mxu0 0
        %1082 = vmatpush1.bf16.msra.mxu0 0
        %1083 = vmatprep.subr.bf16.mxu0 0
        %1084 = vmatpush1.bf16.msra.mxu0 0
        %1085 = vmatprep.subr.bf16.mxu0 0
        %1086 = vmatpush1.bf16.msra.mxu0 0
        %1087 = vmatprep.subr.bf16.mxu0 0
        %1088 = vmatpush1.bf16.msra.mxu0 0
        %1089 = vmatprep.subr.bf16.mxu0 0
        %1090 = vmatpush1.bf16.msra.mxu0 0
        %1091 = vmatprep.subr.bf16.mxu0 0
        %1092 = vmatpush1.bf16.msra.mxu0 0
        %1093 = vmatprep.mubr.bf16.mxu0 0
        %1094 = vmatmul.mubr.bf16.gmra.mrb[0].mxu0 %v1059
        %v1095 = vpop.f32.mrb[0].mxu0
        %v1096 = vadd.f32 0.0, %v1095
        %v1097 = vpop.f32.mrb[0].mxu0
        %v1098 = vpop.f32.mrb[0].mxu0
        %v1099 = vpop.f32.mrb[0].mxu0
        %1100 = vdwg.mxu0
        %v1101 = vadd.f32 %v698, %v1096
        %s1102 = scalar_lea.vmem %s7, %s51
        %v1103 = vld [vmem:[%s1102] sm:$0x1]
        %v1105 = vlaneseq
        %v1106 = vshrl.u32 %v1105, 7
        %v1107 = vsub.s32 0, %v1106
        %v1108 = vrot.slane %v1103, %v1107
        %v1110 = vadd.f32 %v1101, %v1108
        %s1111 = scalar_lea.vmem %s8, %s51
        %v1112 = vld [vmem:[%s1111] sm:$0x1]
        %s1113 = scalar_lea.vmem %s9, %s51
        %v1114 = vld [vmem:[%s1113] sm:$0x1]
        %v1115 = vsel %vm708, %v1110, 0.0
        %1116 = vadd.xlane.f32.xlu0 %v1115
        %v1117 = vpop.xlane.xlu0 %1116
        %v1118 = vmul.f32 %v1117, %v712
        %v1119 = vsub.f32 %v1110, %v1118
        %v1120 = vmul.f32 %v1119, %v1119
        %v1121 = vsel %vm708, %v1120, 0.0
        %1122 = vadd.xlane.f32.xlu0 %v1121
        %v1123 = vpop.xlane.xlu0 %1122
        %v1124 = vmul.f32 %v1123, %v712
        %v1125 = vadd.f32 %v1124, 1e-12
        %v1126 = vrsqrt.pop %v1125
        %v1127 = vmul.f32 %v1119, %v1126
        %v1129 = vlaneseq
        %v1130 = vshrl.u32 %v1129, 7
        %v1131 = vsub.s32 0, %v1130
        %v1132 = vrot.slane %v1112, %v1131
        %v1134 = vmul.f32 %v1127, %v1132
        %v1136 = vlaneseq
        %v1137 = vshrl.u32 %v1136, 7
        %v1138 = vsub.s32 0, %v1137
        %v1139 = vrot.slane %v1114, %v1138
        %v1141 = vadd.f32 %v1134, %v1139
        %s1142 = smul.u32 %s51, 3
        %s1143 = smul.u32 %s1142, 4
        %s1144 = smul.addr %s1143, 4
        %s1145 = scalar_lea.vmem %s10, %s1144
        %v1146 = vld [vmem:[%s1145] sm:$0xf]
        %v1147 = vld [vmem:[%s1145 + $0x4] sm:$0xf]
        %v1148 = vld [vmem:[%s1145 + $0x8] sm:$0xf]
        %v1149 = vld [vmem:[%s1145 + $0xc] sm:$0xf]
        %s1150 = sadd.s32 %s1142, 1
        %s1151 = smul.u32 %s1150, 4
        %s1152 = smul.addr %s1151, 4
        %s1153 = scalar_lea.vmem %s10, %s1152
        %v1154 = vld [vmem:[%s1153] sm:$0xf]
        %v1155 = vld [vmem:[%s1153 + $0x4] sm:$0xf]
        %v1156 = vld [vmem:[%s1153 + $0x8] sm:$0xf]
        %v1157 = vld [vmem:[%s1153 + $0xc] sm:$0xf]
        %s1158 = sadd.s32 %s1142, 2
        %s1159 = smul.u32 %s1158, 4
        %s1160 = smul.addr %s1159, 4
        %s1161 = scalar_lea.vmem %s10, %s1160
        %v1162 = vld [vmem:[%s1161] sm:$0xf]
        %v1163 = vld [vmem:[%s1161 + $0x4] sm:$0xf]
        %v1164 = vld [vmem:[%s1161 + $0x8] sm:$0xf]
        %v1165 = vld [vmem:[%s1161 + $0xc] sm:$0xf]
        %s1166 = scalar_lea.vmem %s11, %s51
        %v1167 = vld [vmem:[%s1166] sm:$0x1]
        %v1168 = vlaneseq
        %v1169 = vshrl.u32 %v1168, 7
        %v1170 = vrot.slane %v1141, 7
        %vm1171 = vcmp.ge.s32.totalorder %v1169, 1
        %v1172 = vsel %vm1171, 1, 0
        %vm1173 = vcmp.eq.s32.totalorder %v1172, 1
        %v1174 = vsel %vm1173, %v1170, 0.0
        %v1175 = vpack.c.bf16 %v1174, %v1174
        %v1176 = vpack.c.bf16 %v1141, %v1141
        %v1181 = vunpack.c.l.b16 %v1154
        %v1182 = vunpack.c.l.b16 %v1155
        %v1183 = vunpack.c.l.b16 %v1156
        %v1184 = vunpack.c.l.b16 %v1157
        %v1185 = vpack.c.b16 %v1182, %v1181
        %v1186 = vpack.c.b16 %v1184, %v1183
        %v1190 = vsel %vm708, %v1176, 0
        %1192 = vmatprep.subr.bf16.mxu0 0
        %1193 = vmatpush1.bf16.msra.mxu0 %v1185
        %1194 = vmatprep.subr.bf16.mxu0 0
        %1195 = vmatpush1.bf16.msra.mxu0 %v1186
        %1196 = vmatprep.subr.bf16.mxu0 0
        %1197 = vmatpush1.bf16.msra.mxu0 0
        %1198 = vmatprep.subr.bf16.mxu0 0
        %1199 = vmatpush1.bf16.msra.mxu0 0
        %1200 = vmatprep.subr.bf16.mxu0 0
        %1201 = vmatpush1.bf16.msra.mxu0 0
        %1202 = vmatprep.subr.bf16.mxu0 0
        %1203 = vmatpush1.bf16.msra.mxu0 0
        %1204 = vmatprep.subr.bf16.mxu0 0
        %1205 = vmatpush1.bf16.msra.mxu0 0
        %1206 = vmatprep.subr.bf16.mxu0 0
        %1207 = vmatpush1.bf16.msra.mxu0 0
        %1208 = vmatprep.subr.bf16.mxu0 0
        %1209 = vmatpush1.bf16.msra.mxu0 0
        %1210 = vmatprep.subr.bf16.mxu0 0
        %1211 = vmatpush1.bf16.msra.mxu0 0
        %1212 = vmatprep.subr.bf16.mxu0 0
        %1213 = vmatpush1.bf16.msra.mxu0 0
        %1214 = vmatprep.subr.bf16.mxu0 0
        %1215 = vmatpush1.bf16.msra.mxu0 0
        %1216 = vmatprep.subr.bf16.mxu0 0
        %1217 = vmatpush1.bf16.msra.mxu0 0
        %1218 = vmatprep.subr.bf16.mxu0 0
        %1219 = vmatpush1.bf16.msra.mxu0 0
        %1220 = vmatprep.subr.bf16.mxu0 0
        %1221 = vmatpush1.bf16.msra.mxu0 0
        %1222 = vmatprep.subr.bf16.mxu0 0
        %1223 = vmatpush1.bf16.msra.mxu0 0
        %1224 = vmatprep.mubr.bf16.mxu0 0
        %1225 = vmatmul.mubr.bf16.gmra.mrb[0].mxu0 %v1190
        %v1226 = vpop.f32.mrb[0].mxu0
        %v1227 = vadd.f32 0.0, %v1226
        %v1228 = vpop.f32.mrb[0].mxu0
        %v1229 = vpop.f32.mrb[0].mxu0
        %v1230 = vpop.f32.mrb[0].mxu0
        %1231 = vdwg.mxu0
        %v1236 = vunpack.c.l.b16 %v1146
        %v1237 = vunpack.c.l.b16 %v1147
        %v1238 = vunpack.c.l.b16 %v1148
        %v1239 = vunpack.c.l.b16 %v1149
        %v1240 = vpack.c.b16 %v1237, %v1236
        %v1241 = vpack.c.b16 %v1239, %v1238
        %v1245 = vsel %vm708, %v1175, 0
        %1247 = vmatprep.subr.bf16.mxu0 0
        %1248 = vmatpush1.bf16.msra.mxu0 %v1240
        %1249 = vmatprep.subr.bf16.mxu0 0
        %1250 = vmatpush1.bf16.msra.mxu0 %v1241
        %1251 = vmatprep.subr.bf16.mxu0 0
        %1252 = vmatpush1.bf16.msra.mxu0 0
        %1253 = vmatprep.subr.bf16.mxu0 0
        %1254 = vmatpush1.bf16.msra.mxu0 0
        %1255 = vmatprep.subr.bf16.mxu0 0
        %1256 = vmatpush1.bf16.msra.mxu0 0
        %1257 = vmatprep.subr.bf16.mxu0 0
        %1258 = vmatpush1.bf16.msra.mxu0 0
        %1259 = vmatprep.subr.bf16.mxu0 0
        %1260 = vmatpush1.bf16.msra.mxu0 0
        %1261 = vmatprep.subr.bf16.mxu0 0
        %1262 = vmatpush1.bf16.msra.mxu0 0
        %1263 = vmatprep.subr.bf16.mxu0 0
        %1264 = vmatpush1.bf16.msra.mxu0 0
        %1265 = vmatprep.subr.bf16.mxu0 0
        %1266 = vmatpush1.bf16.msra.mxu0 0
        %1267 = vmatprep.subr.bf16.mxu0 0
        %1268 = vmatpush1.bf16.msra.mxu0 0
        %1269 = vmatprep.subr.bf16.mxu0 0
        %1270 = vmatpush1.bf16.msra.mxu0 0
        %1271 = vmatprep.subr.bf16.mxu0 0
        %1272 = vmatpush1.bf16.msra.mxu0 0
        %1273 = vmatprep.subr.bf16.mxu0 0
        %1274 = vmatpush1.bf16.msra.mxu0 0
        %1275 = vmatprep.subr.bf16.mxu0 0
        %1276 = vmatpush1.bf16.msra.mxu0 0
        %1277 = vmatprep.subr.bf16.mxu0 0
        %1278 = vmatpush1.bf16.msra.mxu0 0
        %1279 = vmatprep.mubr.bf16.mxu0 0
        %1280 = vmatmul.mubr.bf16.gmra.mrb[0].mxu0 %v1245
        %v1281 = vpop.f32.mrb[0].mxu0
        %v1282 = vadd.f32 %v1227, %v1281
        %v1283 = vpop.f32.mrb[0].mxu0
        %v1284 = vpop.f32.mrb[0].mxu0
        %v1285 = vpop.f32.mrb[0].mxu0
        %1286 = vdwg.mxu0
        %v1287 = vrot.slane %v1141, 1
        %vm1288 = vcmp.lt.s32.totalorder %v1169, 7
        %v1289 = vsel %vm1288, 1, 0
        %vm1290 = vcmp.eq.s32.totalorder %v1289, 1
        %v1291 = vsel %vm1290, %v1287, 0.0
        %v1292 = vpack.c.bf16 %v1291, %v1291
        %v1297 = vunpack.c.l.b16 %v1162
        %v1298 = vunpack.c.l.b16 %v1163
        %v1299 = vunpack.c.l.b16 %v1164
        %v1300 = vunpack.c.l.b16 %v1165
        %v1301 = vpack.c.b16 %v1298, %v1297
        %v1302 = vpack.c.b16 %v1300, %v1299
        %v1306 = vsel %vm708, %v1292, 0
        %1308 = vmatprep.subr.bf16.mxu0 0
        %1309 = vmatpush1.bf16.msra.mxu0 %v1301
        %1310 = vmatprep.subr.bf16.mxu0 0
        %1311 = vmatpush1.bf16.msra.mxu0 %v1302
        %1312 = vmatprep.subr.bf16.mxu0 0
        %1313 = vmatpush1.bf16.msra.mxu0 0
        %1314 = vmatprep.subr.bf16.mxu0 0
        %1315 = vmatpush1.bf16.msra.mxu0 0
        %1316 = vmatprep.subr.bf16.mxu0 0
        %1317 = vmatpush1.bf16.msra.mxu0 0
        %1318 = vmatprep.subr.bf16.mxu0 0
        %1319 = vmatpush1.bf16.msra.mxu0 0
        %1320 = vmatprep.subr.bf16.mxu0 0
        %1321 = vmatpush1.bf16.msra.mxu0 0
        %1322 = vmatprep.subr.bf16.mxu0 0
        %1323 = vmatpush1.bf16.msra.mxu0 0
        %1324 = vmatprep.subr.bf16.mxu0 0
        %1325 = vmatpush1.bf16.msra.mxu0 0
        %1326 = vmatprep.subr.bf16.mxu0 0
        %1327 = vmatpush1.bf16.msra.mxu0 0
        %1328 = vmatprep.subr.bf16.mxu0 0
        %1329 = vmatpush1.bf16.msra.mxu0 0
        %1330 = vmatprep.subr.bf16.mxu0 0
        %1331 = vmatpush1.bf16.msra.mxu0 0
        %1332 = vmatprep.subr.bf16.mxu0 0
        %1333 = vmatpush1.bf16.msra.mxu0 0
        %1334 = vmatprep.subr.bf16.mxu0 0
        %1335 = vmatpush1.bf16.msra.mxu0 0
        %1336 = vmatprep.subr.bf16.mxu0 0
        %1337 = vmatpush1.bf16.msra.mxu0 0
        %1338 = vmatprep.subr.bf16.mxu0 0
        %1339 = vmatpush1.bf16.msra.mxu0 0
        %1340 = vmatprep.mubr.bf16.mxu0 0
        %1341 = vmatmul.mubr.bf16.gmra.mrb[0].mxu0 %v1306
        %v1342 = vpop.f32.mrb[0].mxu0
        %v1343 = vadd.f32 0.0, %v1342
        %v1344 = vpop.f32.mrb[0].mxu0
        %v1345 = vpop.f32.mrb[0].mxu0
        %v1346 = vpop.f32.mrb[0].mxu0
        %1347 = vdwg.mxu0
        %v1348 = vadd.f32 %v1282, %v1343
        %v1350 = vlaneseq
        %v1351 = vshrl.u32 %v1350, 7
        %v1352 = vsub.s32 0, %v1351
        %v1353 = vrot.slane %v1167, %v1352
        %v1355 = vadd.f32 %v1348, %v1353
        %v1356 = vmax.f32 %v1355, 0.0
        %s1357 = smul.u32 %s1142, 8
        %s1358 = smul.addr %s1357, 4
        %s1359 = scalar_lea.vmem %s12, %s1358
        %v1360 = vld [vmem:[%s1359] sm:$0xf]
        %v1361 = vld [vmem:[%s1359 + $0x4] sm:$0xf]
        %v1362 = vld [vmem:[%s1359 + $0x8] sm:$0xf]
        %v1363 = vld [vmem:[%s1359 + $0xc] sm:$0xf]
        %v1364 = vld [vmem:[%s1359 + $0x10] sm:$0xf]
        %v1365 = vld [vmem:[%s1359 + $0x14] sm:$0xf]
        %v1366 = vld [vmem:[%s1359 + $0x18] sm:$0xf]
        %v1367 = vld [vmem:[%s1359 + $0x1c] sm:$0xf]
        %s1368 = smul.u32 %s1150, 8
        %s1369 = smul.addr %s1368, 4
        %s1370 = scalar_lea.vmem %s12, %s1369
        %v1371 = vld [vmem:[%s1370] sm:$0xf]
        %v1372 = vld [vmem:[%s1370 + $0x4] sm:$0xf]
        %v1373 = vld [vmem:[%s1370 + $0x8] sm:$0xf]
        %v1374 = vld [vmem:[%s1370 + $0xc] sm:$0xf]
        %v1375 = vld [vmem:[%s1370 + $0x10] sm:$0xf]
        %v1376 = vld [vmem:[%s1370 + $0x14] sm:$0xf]
        %v1377 = vld [vmem:[%s1370 + $0x18] sm:$0xf]
        %v1378 = vld [vmem:[%s1370 + $0x1c] sm:$0xf]
        %s1379 = smul.u32 %s1158, 8
        %s1380 = smul.addr %s1379, 4
        %s1381 = scalar_lea.vmem %s12, %s1380
        %v1382 = vld [vmem:[%s1381] sm:$0xf]
        %v1383 = vld [vmem:[%s1381 + $0x4] sm:$0xf]
        %v1384 = vld [vmem:[%s1381 + $0x8] sm:$0xf]
        %v1385 = vld [vmem:[%s1381 + $0xc] sm:$0xf]
        %v1386 = vld [vmem:[%s1381 + $0x10] sm:$0xf]
        %v1387 = vld [vmem:[%s1381 + $0x14] sm:$0xf]
        %v1388 = vld [vmem:[%s1381 + $0x18] sm:$0xf]
        %v1389 = vld [vmem:[%s1381 + $0x1c] sm:$0xf]
        %s1390 = scalar_lea.vmem %s13, %s51
        %v1391 = vld [vmem:[%s1390] sm:$0x1]
        %v1392 = vrot.slane %v1356, 7
        %v1393 = vsel %vm1173, %v1392, 0.0
        %v1394 = vpack.c.bf16 %v1393, %v1393
        %v1395 = vpack.c.bf16 %v1356, %v1356
        %v1404 = vunpack.c.l.b16 %v1371
        %v1405 = vunpack.c.l.b16 %v1372
        %v1406 = vunpack.c.l.b16 %v1373
        %v1407 = vunpack.c.l.b16 %v1374
        %v1408 = vunpack.c.l.b16 %v1375
        %v1409 = vunpack.c.l.b16 %v1376
        %v1410 = vunpack.c.l.b16 %v1377
        %v1411 = vunpack.c.l.b16 %v1378
        %v1412 = vpack.c.b16 %v1405, %v1404
        %v1413 = vpack.c.b16 %v1407, %v1406
        %v1414 = vpack.c.b16 %v1409, %v1408
        %v1415 = vpack.c.b16 %v1411, %v1410
        %vm1420 = vcmask 523264
        %v1422 = vsel %vm1420, %v1395, 0
        %1424 = vmatprep.subr.bf16.mxu0 0
        %1425 = vmatpush1.bf16.msra.mxu0 %v1412
        %1426 = vmatprep.subr.bf16.mxu0 0
        %1427 = vmatpush1.bf16.msra.mxu0 %v1413
        %1428 = vmatprep.subr.bf16.mxu0 0
        %1429 = vmatpush1.bf16.msra.mxu0 %v1414
        %1430 = vmatprep.subr.bf16.mxu0 0
        %1431 = vmatpush1.bf16.msra.mxu0 %v1415
        %1432 = vmatprep.subr.bf16.mxu0 0
        %1433 = vmatpush1.bf16.msra.mxu0 0
        %1434 = vmatprep.subr.bf16.mxu0 0
        %1435 = vmatpush1.bf16.msra.mxu0 0
        %1436 = vmatprep.subr.bf16.mxu0 0
        %1437 = vmatpush1.bf16.msra.mxu0 0
        %1438 = vmatprep.subr.bf16.mxu0 0
        %1439 = vmatpush1.bf16.msra.mxu0 0
        %1440 = vmatprep.subr.bf16.mxu0 0
        %1441 = vmatpush1.bf16.msra.mxu0 0
        %1442 = vmatprep.subr.bf16.mxu0 0
        %1443 = vmatpush1.bf16.msra.mxu0 0
        %1444 = vmatprep.subr.bf16.mxu0 0
        %1445 = vmatpush1.bf16.msra.mxu0 0
        %1446 = vmatprep.subr.bf16.mxu0 0
        %1447 = vmatpush1.bf16.msra.mxu0 0
        %1448 = vmatprep.subr.bf16.mxu0 0
        %1449 = vmatpush1.bf16.msra.mxu0 0
        %1450 = vmatprep.subr.bf16.mxu0 0
        %1451 = vmatpush1.bf16.msra.mxu0 0
        %1452 = vmatprep.subr.bf16.mxu0 0
        %1453 = vmatpush1.bf16.msra.mxu0 0
        %1454 = vmatprep.subr.bf16.mxu0 0
        %1455 = vmatpush1.bf16.msra.mxu0 0
        %1456 = vmatprep.mubr.bf16.mxu0 0
        %1457 = vmatmul.mubr.bf16.gmra.mrb[0].mxu0 %v1422
        %v1458 = vpop.f32.mrb[0].mxu0
        %v1459 = vadd.f32 0.0, %v1458
        %v1460 = vpop.f32.mrb[0].mxu0
        %v1461 = vpop.f32.mrb[0].mxu0
        %v1462 = vpop.f32.mrb[0].mxu0
        %1463 = vdwg.mxu0
        %v1472 = vunpack.c.l.b16 %v1360
        %v1473 = vunpack.c.l.b16 %v1361
        %v1474 = vunpack.c.l.b16 %v1362
        %v1475 = vunpack.c.l.b16 %v1363
        %v1476 = vunpack.c.l.b16 %v1364
        %v1477 = vunpack.c.l.b16 %v1365
        %v1478 = vunpack.c.l.b16 %v1366
        %v1479 = vunpack.c.l.b16 %v1367
        %v1480 = vpack.c.b16 %v1473, %v1472
        %v1481 = vpack.c.b16 %v1475, %v1474
        %v1482 = vpack.c.b16 %v1477, %v1476
        %v1483 = vpack.c.b16 %v1479, %v1478
        %v1489 = vsel %vm1420, %v1394, 0
        %1491 = vmatprep.subr.bf16.mxu0 0
        %1492 = vmatpush1.bf16.msra.mxu0 %v1480
        %1493 = vmatprep.subr.bf16.mxu0 0
        %1494 = vmatpush1.bf16.msra.mxu0 %v1481
        %1495 = vmatprep.subr.bf16.mxu0 0
        %1496 = vmatpush1.bf16.msra.mxu0 %v1482
        %1497 = vmatprep.subr.bf16.mxu0 0
        %1498 = vmatpush1.bf16.msra.mxu0 %v1483
        %1499 = vmatprep.subr.bf16.mxu0 0
        %1500 = vmatpush1.bf16.msra.mxu0 0
        %1501 = vmatprep.subr.bf16.mxu0 0
        %1502 = vmatpush1.bf16.msra.mxu0 0
        %1503 = vmatprep.subr.bf16.mxu0 0
        %1504 = vmatpush1.bf16.msra.mxu0 0
        %1505 = vmatprep.subr.bf16.mxu0 0
        %1506 = vmatpush1.bf16.msra.mxu0 0
        %1507 = vmatprep.subr.bf16.mxu0 0
        %1508 = vmatpush1.bf16.msra.mxu0 0
        %1509 = vmatprep.subr.bf16.mxu0 0
        %1510 = vmatpush1.bf16.msra.mxu0 0
        %1511 = vmatprep.subr.bf16.mxu0 0
        %1512 = vmatpush1.bf16.msra.mxu0 0
        %1513 = vmatprep.subr.bf16.mxu0 0
        %1514 = vmatpush1.bf16.msra.mxu0 0
        %1515 = vmatprep.subr.bf16.mxu0 0
        %1516 = vmatpush1.bf16.msra.mxu0 0
        %1517 = vmatprep.subr.bf16.mxu0 0
        %1518 = vmatpush1.bf16.msra.mxu0 0
        %1519 = vmatprep.subr.bf16.mxu0 0
        %1520 = vmatpush1.bf16.msra.mxu0 0
        %1521 = vmatprep.subr.bf16.mxu0 0
        %1522 = vmatpush1.bf16.msra.mxu0 0
        %1523 = vmatprep.mubr.bf16.mxu0 0
        %1524 = vmatmul.mubr.bf16.gmra.mrb[0].mxu0 %v1489
        %v1525 = vpop.f32.mrb[0].mxu0
        %v1526 = vadd.f32 %v1459, %v1525
        %v1527 = vpop.f32.mrb[0].mxu0
        %v1528 = vpop.f32.mrb[0].mxu0
        %v1529 = vpop.f32.mrb[0].mxu0
        %1530 = vdwg.mxu0
        %v1531 = vrot.slane %v1356, 1
        %v1532 = vsel %vm1290, %v1531, 0.0
        %v1533 = vpack.c.bf16 %v1532, %v1532
        %v1542 = vunpack.c.l.b16 %v1382
        %v1543 = vunpack.c.l.b16 %v1383
        %v1544 = vunpack.c.l.b16 %v1384
        %v1545 = vunpack.c.l.b16 %v1385
        %v1546 = vunpack.c.l.b16 %v1386
        %v1547 = vunpack.c.l.b16 %v1387
        %v1548 = vunpack.c.l.b16 %v1388
        %v1549 = vunpack.c.l.b16 %v1389
        %v1550 = vpack.c.b16 %v1543, %v1542
        %v1551 = vpack.c.b16 %v1545, %v1544
        %v1552 = vpack.c.b16 %v1547, %v1546
        %v1553 = vpack.c.b16 %v1549, %v1548
        %v1559 = vsel %vm1420, %v1533, 0
        %1561 = vmatprep.subr.bf16.mxu0 0
        %1562 = vmatpush1.bf16.msra.mxu0 %v1550
        %1563 = vmatprep.subr.bf16.mxu0 0
        %1564 = vmatpush1.bf16.msra.mxu0 %v1551
        %1565 = vmatprep.subr.bf16.mxu0 0
        %1566 = vmatpush1.bf16.msra.mxu0 %v1552
        %1567 = vmatprep.subr.bf16.mxu0 0
        %1568 = vmatpush1.bf16.msra.mxu0 %v1553
        %1569 = vmatprep.subr.bf16.mxu0 0
        %1570 = vmatpush1.bf16.msra.mxu0 0
        %1571 = vmatprep.subr.bf16.mxu0 0
        %1572 = vmatpush1.bf16.msra.mxu0 0
        %1573 = vmatprep.subr.bf16.mxu0 0
        %1574 = vmatpush1.bf16.msra.mxu0 0
        %1575 = vmatprep.subr.bf16.mxu0 0
        %1576 = vmatpush1.bf16.msra.mxu0 0
        %1577 = vmatprep.subr.bf16.mxu0 0
        %1578 = vmatpush1.bf16.msra.mxu0 0
        %1579 = vmatprep.subr.bf16.mxu0 0
        %1580 = vmatpush1.bf16.msra.mxu0 0
        %1581 = vmatprep.subr.bf16.mxu0 0
        %1582 = vmatpush1.bf16.msra.mxu0 0
        %1583 = vmatprep.subr.bf16.mxu0 0
        %1584 = vmatpush1.bf16.msra.mxu0 0
        %1585 = vmatprep.subr.bf16.mxu0 0
        %1586 = vmatpush1.bf16.msra.mxu0 0
        %1587 = vmatprep.subr.bf16.mxu0 0
        %1588 = vmatpush1.bf16.msra.mxu0 0
        %1589 = vmatprep.subr.bf16.mxu0 0
        %1590 = vmatpush1.bf16.msra.mxu0 0
        %1591 = vmatprep.subr.bf16.mxu0 0
        %1592 = vmatpush1.bf16.msra.mxu0 0
        %1593 = vmatprep.mubr.bf16.mxu0 0
        %1594 = vmatmul.mubr.bf16.gmra.mrb[0].mxu0 %v1559
        %v1595 = vpop.f32.mrb[0].mxu0
        %v1596 = vadd.f32 0.0, %v1595
        %v1597 = vpop.f32.mrb[0].mxu0
        %v1598 = vpop.f32.mrb[0].mxu0
        %v1599 = vpop.f32.mrb[0].mxu0
        %1600 = vdwg.mxu0
        %v1601 = vadd.f32 %v1526, %v1596
        %v1603 = vlaneseq
        %v1604 = vshrl.u32 %v1603, 7
        %v1605 = vsub.s32 0, %v1604
        %v1606 = vrot.slane %v1391, %v1605
        %v1608 = vadd.f32 %v1601, %v1606
        %v1609 = vadd.f32 %v1110, %v1608
        %1610 = vst.msk [vmem:[#allocation2] sm:$0xff] %vm708, %v1609
        %p1611 = scmp.eq.s32.totalorder %s51, 1
        // Predicated region
        $region101: #{onnx_text_encoder.1} parent=95 // pred_check
          %p1612 = pneg %p1611
        $region102: #{onnx_text_encoder.1} parent=95 // pred_check_branch
          %1614 = sbr.rel (%p1612) target = $region104
        $region103: #{onnx_text_encoder.1} parent=95 // pred_region
          %v1615 = vld [vmem:[%s14] sm:$0x1]
          %v1616 = vld [vmem:[%s15] sm:$0x1]
          %v1617 = vsel %vm708, %v1609, 0.0
          %1618 = vadd.xlane.f32.xlu0 %v1617
          %v1619 = vpop.xlane.xlu0 %1618
          %v1620 = vmul.f32 %v1619, %v712
          %v1621 = vsub.f32 %v1609, %v1620
          %v1622 = vmul.f32 %v1621, %v1621
          %v1623 = vsel %vm708, %v1622, 0.0
          %1624 = vadd.xlane.f32.xlu0 %v1623
          %v1625 = vpop.xlane.xlu0 %1624
          %v1626 = vmul.f32 %v1625, %v712
          %v1627 = vadd.f32 %v1626, 1e-12
          %v1628 = vrsqrt.pop %v1627
          %v1629 = vmul.f32 %v1621, %v1628
          %v1631 = vlaneseq
          %v1632 = vshrl.u32 %v1631, 7
          %v1633 = vsub.s32 0, %v1632
          %v1634 = vrot.slane %v1615, %v1633
          %v1636 = vmul.f32 %v1629, %v1634
          %v1638 = vlaneseq
          %v1639 = vshrl.u32 %v1638, 7
          %v1640 = vsub.s32 0, %v1639
          %v1641 = vrot.slane %v1616, %v1640
          %v1643 = vadd.f32 %v1636, %v1641
          %1644 = vst.msk [vmem:[%s670] sm:$0xff] %vm708, %v1643
          %vm1645 = vcmp.lt.s32.totalorder %v1169, %v701
          %v1646 = vld [vmem:[%s16] sm:$0xf]
          %v1647 = vld [vmem:[%s16 + $0x4] sm:$0xf]
          %v1648 = vld [vmem:[%s16 + $0x8] sm:$0xf]
          %v1649 = vld [vmem:[%s16 + $0xc] sm:$0xf]
          %v1650 = vpack.c.bf16 %v1643, %v1643
          %v1651 = vld [vmem:[%s17] sm:$0x1]
          %v1653 = vlaneseq
          %v1654 = vshrl.u32 %v1653, 7
          %v1655 = vsub.s32 0, %v1654
          %v1656 = vrot.slane %v1651, %v1655
          %v1662 = vunpack.c.l.b16 %v1646
          %v1663 = vunpack.c.l.b16 %v1647
          %v1664 = vunpack.c.l.b16 %v1648
          %v1665 = vunpack.c.l.b16 %v1649
          %v1666 = vpack.c.b16 %v1663, %v1662
          %v1667 = vpack.c.b16 %v1665, %v1664
          %v1671 = vsel %vm708, %v1650, 0
          %1673 = vmatprep.subr.bf16.mxu0 0
          %1674 = vmatpush1.bf16.msra.mxu0 %v1666
          %1675 = vmatprep.subr.bf16.mxu0 0
          %1676 = vmatpush1.bf16.msra.mxu0 %v1667
          %1677 = vmatprep.subr.bf16.mxu0 0
          %1678 = vmatpush1.bf16.msra.mxu0 0
          %1679 = vmatprep.subr.bf16.mxu0 0
          %1680 = vmatpush1.bf16.msra.mxu0 0
          %1681 = vmatprep.subr.bf16.mxu0 0
          %1682 = vmatpush1.bf16.msra.mxu0 0
          %1683 = vmatprep.subr.bf16.mxu0 0
          %1684 = vmatpush1.bf16.msra.mxu0 0
          %1685 = vmatprep.subr.bf16.mxu0 0
          %1686 = vmatpush1.bf16.msra.mxu0 0
          %1687 = vmatprep.subr.bf16.mxu0 0
          %1688 = vmatpush1.bf16.msra.mxu0 0
          %1689 = vmatprep.subr.bf16.mxu0 0
          %1690 = vmatpush1.bf16.msra.mxu0 0
          %1691 = vmatprep.subr.bf16.mxu0 0
          %1692 = vmatpush1.bf16.msra.mxu0 0
          %1693 = vmatprep.subr.bf16.mxu0 0
          %1694 = vmatpush1.bf16.msra.mxu0 0
          %1695 = vmatprep.subr.bf16.mxu0 0
          %1696 = vmatpush1.bf16.msra.mxu0 0
          %1697 = vmatprep.subr.bf16.mxu0 0
          %1698 = vmatpush1.bf16.msra.mxu0 0
          %1699 = vmatprep.subr.bf16.mxu0 0
          %1700 = vmatpush1.bf16.msra.mxu0 0
          %1701 = vmatprep.subr.bf16.mxu0 0
          %1702 = vmatpush1.bf16.msra.mxu0 0
          %1703 = vmatprep.subr.bf16.mxu0 0
          %1704 = vmatpush1.bf16.msra.mxu0 0
          %1705 = vmatprep.mubr.bf16.mxu0 0
          %1706 = vmatmul.mubr.bf16.gmra.mrb[0].mxu0 %v1671
          %v1707 = vpop.f32.mrb[0].mxu0
          %v1708 = vadd.f32 %v1656, %v1707
          %v1709 = vpop.f32.mrb[0].mxu0
          %v1710 = vpop.f32.mrb[0].mxu0
          %v1711 = vpop.f32.mrb[0].mxu0
          %1712 = vdwg.mxu0
          %v1713 = vld [vmem:[%s18] sm:$0xf]
          %v1714 = vld [vmem:[%s18 + $0x4] sm:$0xf]
          %v1715 = vld [vmem:[%s18 + $0x8] sm:$0xf]
          %v1716 = vld [vmem:[%s18 + $0xc] sm:$0xf]
          %v1717 = vld [vmem:[%s19] sm:$0x1]
          %v1719 = vlaneseq
          %v1720 = vshrl.u32 %v1719, 7
          %v1721 = vsub.s32 0, %v1720
          %v1722 = vrot.slane %v1717, %v1721
          %v1728 = vunpack.c.l.b16 %v1713
          %v1729 = vunpack.c.l.b16 %v1714
          %v1730 = vunpack.c.l.b16 %v1715
          %v1731 = vunpack.c.l.b16 %v1716
          %v1732 = vpack.c.b16 %v1729, %v1728
          %v1733 = vpack.c.b16 %v1731, %v1730
          %1736 = vmatprep.subr.bf16.mxu0 0
          %1737 = vmatpush1.bf16.msra.mxu0 %v1732
          %1738 = vmatprep.subr.bf16.mxu0 0
          %1739 = vmatpush1.bf16.msra.mxu0 %v1733
          %1740 = vmatprep.subr.bf16.mxu0 0
          %1741 = vmatpush1.bf16.msra.mxu0 0
          %1742 = vmatprep.subr.bf16.mxu0 0
          %1743 = vmatpush1.bf16.msra.mxu0 0
          %1744 = vmatprep.subr.bf16.mxu0 0
          %1745 = vmatpush1.bf16.msra.mxu0 0
          %1746 = vmatprep.subr.bf16.mxu0 0
          %1747 = vmatpush1.bf16.msra.mxu0 0
          %1748 = vmatprep.subr.bf16.mxu0 0
          %1749 = vmatpush1.bf16.msra.mxu0 0
          %1750 = vmatprep.subr.bf16.mxu0 0
          %1751 = vmatpush1.bf16.msra.mxu0 0
          %1752 = vmatprep.subr.bf16.mxu0 0
          %1753 = vmatpush1.bf16.msra.mxu0 0
          %1754 = vmatprep.subr.bf16.mxu0 0
          %1755 = vmatpush1.bf16.msra.mxu0 0
          %1756 = vmatprep.subr.bf16.mxu0 0
          %1757 = vmatpush1.bf16.msra.mxu0 0
          %1758 = vmatprep.subr.bf16.mxu0 0
          %1759 = vmatpush1.bf16.msra.mxu0 0
          %1760 = vmatprep.subr.bf16.mxu0 0
          %1761 = vmatpush1.bf16.msra.mxu0 0
          %1762 = vmatprep.subr.bf16.mxu0 0
          %1763 = vmatpush1.bf16.msra.mxu0 0
          %1764 = vmatprep.subr.bf16.mxu0 0
          %1765 = vmatpush1.bf16.msra.mxu0 0
          %1766 = vmatprep.subr.bf16.mxu0 0
          %1767 = vmatpush1.bf16.msra.mxu0 0
          %1768 = vmatprep.mubr.bf16.mxu0 0
          %1769 = vmatmul.mubr.bf16.gmra.mrb[0].mxu0 %v1671
          %v1770 = vpop.f32.mrb[0].mxu0
          %v1771 = vadd.f32 %v1722, %v1770
          %v1772 = vpop.f32.mrb[0].mxu0
          %v1773 = vpop.f32.mrb[0].mxu0
          %v1774 = vpop.f32.mrb[0].mxu0
          %1775 = vdwg.mxu0
          %v1776 = vsel %vm1645, 1, 0
          %vm1777 = vcmp.eq.s32.totalorder %v1776, 1
          %v1778 = vsel %vm1777, %v1708, 0.0
          %1779 = vst.msk [vmem:[%s677] sm:$0xff] %vm708, %v1778
          %v1780 = vsel %vm1777, %v1771, 0.0
          %1781 = vst.msk [vmem:[%s684] sm:$0xff] %vm708, %v1780
        $region104: #{onnx_text_encoder.1} parent=95 // pred_fallthru
          _
        %s1782 = sand.u32 %s470, 1
        %s1783 = scalar_lea.sflag [#allocation7], %s1782
        %s1784 = sand.u32 %s470, 1
        %s1785 = smul.addr %s1784, 8
        %s1786 = scalar_lea.vmem [#allocation6], %s1785
        %s1787 = sand.u32 %s46, 1
        %s1788 = scalar_lea.sflag [#allocation9], %s1787
        %s1789 = sand.u32 %s496, 1
        %s1790 = smul.addr %s1789, 8
        %s1791 = scalar_lea.vmem [#allocation8], %s1790
        %s1792 = sand.u32 %s46, 1
        %s1793 = scalar_lea.sflag [#allocation9], %s1792
        %s1794 = sand.u32 %s522, 1
        %s1795 = smul.addr %s1794, 8
        %s1796 = scalar_lea.vmem [#allocation10], %s1795
        // Predicated region
        $region105: #{onnx_text_encoder.1} parent=95 // pred_check
          %p1797 = pneg %p480
        $region106: #{onnx_text_encoder.1} parent=95 // pred_check_branch
          %1799 = sbr.rel (%p1797) target = $region108
        $region107: #{onnx_text_encoder.1} parent=95 // pred_region
          %s1801 = ssub.s32 128, 128
          %1802 = vsyncadd %s1783, %s1801
          %s1803 = smul.addr %s50, 128
          %s1804 = scalar_lea.hbm %s20, %s1803
          %s1806 = sshll.u32 %s1786, 4
          %s1807 = int_to_ptr.vmem [resolvable:$true] %s1806
          %1809 = dma.vmem_to_hbm [thread:$0]  %s1807, 128, %s1804, %s1783
        $region108: #{onnx_text_encoder.1} parent=95 // pred_fallthru
          _
        // Predicated region
        $region109: #{onnx_text_encoder.1} parent=95 // pred_check
          %p1810 = pneg %p506
        $region110: #{onnx_text_encoder.1} parent=95 // pred_check_branch
          %1812 = sbr.rel (%p1810) target = $region112
        $region111: #{onnx_text_encoder.1} parent=95 // pred_region
          %s1814 = ssub.s32 128, 128
          %1815 = vsyncadd %s1788, %s1814
          %s1816 = smul.addr %s50, 128
          %s1817 = scalar_lea.hbm %s21, %s1816
          %s1819 = sshll.u32 %s1791, 4
          %s1820 = int_to_ptr.vmem [resolvable:$true] %s1819
          %1822 = dma.vmem_to_hbm [thread:$0]  %s1820, 128, %s1817, %s1788
        $region112: #{onnx_text_encoder.1} parent=95 // pred_fallthru
          _
        // Predicated region
        $region113: #{onnx_text_encoder.1} parent=95 // pred_check
          %p1823 = pneg %p532
        $region114: #{onnx_text_encoder.1} parent=95 // pred_check_branch
          %1825 = sbr.rel (%p1823) target = $region116
        $region115: #{onnx_text_encoder.1} parent=95 // pred_region
          %s1827 = ssub.s32 128, 128
          %1828 = vsyncadd %s1793, %s1827
          %s1829 = smul.addr %s50, 128
          %s1830 = scalar_lea.hbm %s22, %s1829
          %s1832 = sshll.u32 %s1796, 4
          %s1833 = int_to_ptr.vmem [resolvable:$true] %s1832
          %1835 = dma.vmem_to_hbm [thread:$0]  %s1833, 128, %s1830, %s1793
        $region116: #{onnx_text_encoder.1} parent=95 // pred_fallthru
          _
      $region96: #{onnx_text_encoder.1} parent=5 // pred_fallthru
        _
      %p1836 = scmp.le.s32.totalorder 2, %s41
      // Predicated region
      $region117: #{onnx_text_encoder.1} parent=5 // pred_check
        %p1837 = pneg %p1836
      $region118: #{onnx_text_encoder.1} parent=5 // pred_check_branch
        %1839 = sbr.rel (%p1837) target = $region120
      $region119: #{onnx_text_encoder.1} parent=5 // pred_region
        %s1840 = ssub.s32 %s41, 2
        // Predicated region
        $region121: #{onnx_text_encoder.1} parent=119 // pred_check
          %p1841 = pneg %p486
        $region122: #{onnx_text_encoder.1} parent=119 // pred_check_branch
          %1843 = sbr.rel (%p1841) target = $region124
        $region123: #{onnx_text_encoder.1} parent=119 // pred_region
          %s1844 = sand.u32 %s471, 1
          %s1845 = scalar_lea.sflag [#allocation7], %s1844
          %s1846 = sand.u32 %s471, 1
          %s1847 = smul.addr %s1846, 8
          %s1848 = scalar_lea.vmem [#allocation6], %s1847
          %1849 = dma.done %s1845, 128
        $region124: #{onnx_text_encoder.1} parent=119 // pred_fallthru
          _
        // Predicated region
        $region125: #{onnx_text_encoder.1} parent=119 // pred_check
          %p1850 = pneg %p512
        $region126: #{onnx_text_encoder.1} parent=119 // pred_check_branch
          %1852 = sbr.rel (%p1850) target = $region128
        $region127: #{onnx_text_encoder.1} parent=119 // pred_region
          %s1853 = sand.u32 %s47, 1
          %s1854 = scalar_lea.sflag [#allocation9], %s1853
          %s1855 = sand.u32 %s497, 1
          %s1856 = smul.addr %s1855, 8
          %s1857 = scalar_lea.vmem [#allocation8], %s1856
          %1858 = dma.done %s1854, 128
        $region128: #{onnx_text_encoder.1} parent=119 // pred_fallthru
          _
        // Predicated region
        $region129: #{onnx_text_encoder.1} parent=119 // pred_check
          %p1859 = pneg %p538
        $region130: #{onnx_text_encoder.1} parent=119 // pred_check_branch
          %1861 = sbr.rel (%p1859) target = $region132
        $region131: #{onnx_text_encoder.1} parent=119 // pred_region
          %s1862 = sand.u32 %s47, 1
          %s1863 = scalar_lea.sflag [#allocation9], %s1862
          %s1864 = sand.u32 %s523, 1
          %s1865 = smul.addr %s1864, 8
          %s1866 = scalar_lea.vmem [#allocation10], %s1865
          %1867 = dma.done %s1863, 128
        $region132: #{onnx_text_encoder.1} parent=119 // pred_fallthru
          _
      $region120: #{onnx_text_encoder.1} parent=5 // pred_fallthru
        _
    $region6: #{onnx_text_encoder.1} parent=1 // loop_footer
      %s45 = sadd.s32 1, %s41
    $region7: #{onnx_text_encoder.1} parent=1 // loop_footer_branch
      %40 = sbr.rel target = $region3
    $region8: #{onnx_text_encoder.1} parent=1 // loop_exit
      _
    %1868 = vsyncpa [#allocation7], 1
    %s1869 = scalar_lea.sflag [#allocation7], 1
    %1870 = vsyncpa %s1869, 1
    %1871 = vsyncpa [#allocation9], 1
    %s1872 = scalar_lea.sflag [#allocation9], 1
    %1873 = vsyncpa %s1872, 1

</llo_original>
